<compile_context>
chip_gen: v5e
topology: v5e:2x2
jax: 0.10.0
libtpu: 0.0.40
codegen_flags: <defaults>
</compile_context>

<pallas_src>
import functools

import jax
import jax.numpy as jnp
from jax import lax
from jax.experimental import pallas as pl
from jax.experimental.pallas import tpu as pltpu

EPS = 1e-5
VMEM_LIMIT = 32 * 1024 * 1024   # conservative; fits v5e/v6e/v7x scoped VMEM


# ---------------------------------------------------------------------------
# Kernel 1: 3x3 conv (single K=9*Cin bf16 matmul) + folded BN + ReLU.
# Output is written in the zero-padded flattened layout kernel-2 consumes.
# ---------------------------------------------------------------------------
def conv3x3_bn_relu_kernel(x_ref, mask_ref, w_ref, scale_ref, shift_ref, o_ref,
                           *, wp, m):
    # x_ref:    (RB, Cin)  one padded sample, rows = flattened (h, w)
    # w_ref:    (9*Cin, Cout) bf16, taps stacked kh-major along K
    # mask_ref: (m, 1)     1.0 on valid output pixels, 0.0 on the pad border
    taps = [x_ref[kh * wp + kw: kh * wp + kw + m, :]
            for kh in range(3) for kw in range(3)]
    patch = jnp.concatenate(taps, axis=-1).astype(jnp.bfloat16)       # (m, 9*Cin)
    acc = jnp.dot(patch, w_ref[...], preferred_element_type=jnp.float32)
    y = jnp.maximum(acc * scale_ref[...] + shift_ref[...], 0.0)       # bn1 + relu
    o_ref[...] = y * mask_ref[...]                  # exact zeros in pad border


# ---------------------------------------------------------------------------
# Kernel 2: 3x3 conv (single K=9*Cout bf16 matmul) + folded BN2 + SE block
#           + 1x1 match_channels identity + residual add + final ReLU.
# ---------------------------------------------------------------------------
def conv2_se_residual_kernel(a_ref, xb_ref, mask_ref, w2_ref, scale_ref,
                             shift_ref, wm_ref, bm_ref, wfc1_ref, bfc1_ref,
                             wfc2_ref, bfc2_ref, o_ref, *, wp, m, inv_hw):
    # a_ref:  (MA, Cout)  conv1 output in padded layout (zeros on border)
    # xb_ref: (RB, Cin)   original padded input (for the 1x1 identity conv)
    taps = [a_ref[kh * wp + kw: kh * wp + kw + m, :]
            for kh in range(3) for kw in range(3)]
    patch = jnp.concatenate(taps, axis=-1).astype(jnp.bfloat16)       # (m, 9*Cout)
    y = jnp.dot(patch, w2_ref[...], preferred_element_type=jnp.float32)
    y = y * scale_ref[...] + shift_ref[...]                            # bn2

    # SE: global average pool over valid pixels -> fc1 -> relu -> fc2 -> sigmoid
    mask = mask_ref[...]                                               # (m, 1)
    pooled = jnp.sum(y * mask, axis=0, keepdims=True) * inv_hw         # (1, Cout)
    hid = jnp.maximum(
        jnp.dot(pooled, wfc1_ref[...], preferred_element_type=jnp.float32)
        + bfc1_ref[...], 0.0)
    gate = jax.nn.sigmoid(
        jnp.dot(hid, wfc2_ref[...], preferred_element_type=jnp.float32)
        + bfc2_ref[...])                                               # (1, Cout)

    # 1x1 match_channels on the original input (residual identity)
    ident_in = xb_ref[2 * wp + 2: 2 * wp + 2 + m, :].astype(jnp.bfloat16)
    identity = jnp.dot(ident_in, wm_ref[...],
                       preferred_element_type=jnp.float32) + bm_ref[...]

    o_ref[...] = jnp.maximum(y * gate + identity, 0.0)


# ---------------------------------------------------------------------------
# pallas_call wrappers
# ---------------------------------------------------------------------------
def conv1_call(xb, mask1, w1cat, s1, t1, *, H, W):
    N, RB, Cin = xb.shape
    Cout = w1cat.shape[-1]
    Wp = W + 2
    MA = (H + 3) * Wp
    kernel = functools.partial(conv3x3_bn_relu_kernel, wp=Wp, m=MA)
    return pl.pallas_call(
        kernel,
        out_shape=jax.ShapeDtypeStruct((N, MA, Cout), jnp.float32),
        grid=(N,),
        in_specs=[
            pl.BlockSpec((None, RB, Cin), lambda n: (n, 0, 0)),
            pl.BlockSpec((MA, 1), lambda n: (0, 0)),
            pl.BlockSpec((9 * Cin, Cout), lambda n: (0, 0)),
            pl.BlockSpec((1, Cout), lambda n: (0, 0)),
            pl.BlockSpec((1, Cout), lambda n: (0, 0)),
        ],
        out_specs=pl.BlockSpec((None, MA, Cout), lambda n: (n, 0, 0)),
        compiler_params=pltpu.CompilerParams(
            dimension_semantics=("parallel",),
            vmem_limit_bytes=VMEM_LIMIT),
    )(xb, mask1, w1cat, s1, t1)


def conv2_se_call(a, xb, mask2, w2cat, s2, t2, wm, bm, w1, b1, w2fc, b2, *, H, W):
    N, MA, Cout = a.shape
    RB, Cin = xb.shape[1], xb.shape[2]
    Wp = W + 2
    M2 = H * Wp
    Cr = w1.shape[-1]
    kernel = functools.partial(conv2_se_residual_kernel, wp=Wp, m=M2,
                               inv_hw=1.0 / float(H * W))
    return pl.pallas_call(
        kernel,
        out_shape=jax.ShapeDtypeStruct((N, M2, Cout), jnp.float32),
        grid=(N,),
        in_specs=[
            pl.BlockSpec((None, MA, Cout), lambda n: (n, 0, 0)),
            pl.BlockSpec((None, RB, Cin), lambda n: (n, 0, 0)),
            pl.BlockSpec((M2, 1), lambda n: (0, 0)),
            pl.BlockSpec((9 * Cout, Cout), lambda n: (0, 0)),
            pl.BlockSpec((1, Cout), lambda n: (0, 0)),
            pl.BlockSpec((1, Cout), lambda n: (0, 0)),
            pl.BlockSpec((Cin, Cout), lambda n: (0, 0)),
            pl.BlockSpec((1, Cout), lambda n: (0, 0)),
            pl.BlockSpec((Cout, Cr), lambda n: (0, 0)),
            pl.BlockSpec((1, Cr), lambda n: (0, 0)),
            pl.BlockSpec((Cr, Cout), lambda n: (0, 0)),
            pl.BlockSpec((1, Cout), lambda n: (0, 0)),
        ],
        out_specs=pl.BlockSpec((None, M2, Cout), lambda n: (n, 0, 0)),
        compiler_params=pltpu.CompilerParams(
            dimension_semantics=("parallel",),
            vmem_limit_bytes=VMEM_LIMIT),
    )(a, xb, mask2, w2cat, s2, t2, wm, bm, w1, b1, w2fc, b2)


# ---------------------------------------------------------------------------
# Host-side parameter prep + forward
# ---------------------------------------------------------------------------
def tap_weights_cat(w_oihw):
    """(Cout, Cin, 3, 3) torch conv weight -> (9*Cin, Cout) bf16, kh-major."""
    cout, cin = w_oihw.shape[0], w_oihw.shape[1]
    return (jnp.transpose(w_oihw, (2, 3, 1, 0))
            .reshape(9 * cin, cout).astype(jnp.bfloat16))


def bn_fold(gamma, beta, mean, var, conv_bias):
    """Fold BN running stats AND the conv bias into (scale, shift)."""
    scale = gamma * lax.rsqrt(var + EPS)
    shift = beta + (conv_bias - mean) * scale
    return scale[None, :].astype(jnp.float32), shift[None, :].astype(jnp.float32)


def residual_block_forward(x_nchw, p):
    N, Cin, H, W = x_nchw.shape
    Cout = p["conv1_w"].shape[0]
    Wp = W + 2
    MA = (H + 3) * Wp
    M2 = H * Wp

    x_nhwc = jnp.transpose(x_nchw, (0, 2, 3, 1))
    # Layout "B": x(i, j) lives at flat row (i+2)*Wp + (j+2); zeros elsewhere.
    xb = jnp.pad(x_nhwc, ((0, 0), (2, 4), (2, 0), (0, 0))
                 ).reshape(N, (H + 6) * Wp, Cin)

    # validity masks (tiny, shared across batch/channels)
    rows1 = jnp.arange(MA)
    hp, wq = rows1 // Wp, rows1 % Wp
    mask1 = (((hp >= 1) & (hp <= H)) & ((wq >= 1) & (wq <= W))
             ).astype(jnp.float32)[:, None]
    mask2 = ((jnp.arange(M2) % Wp) < W).astype(jnp.float32)[:, None]

    # conv1 + bn1 + relu (output in padded layout, border zeroed)
    s1, t1 = bn_fold(p["bn1_gamma"], p["bn1_beta"], p["bn1_mean"], p["bn1_var"],
                     p["conv1_b"])
    a = conv1_call(xb, mask1, tap_weights_cat(p["conv1_w"]), s1, t1, H=H, W=W)

    # conv2 + bn2 + SE + 1x1 identity + residual + relu (fully fused)
    s2, t2 = bn_fold(p["bn2_gamma"], p["bn2_beta"], p["bn2_mean"], p["bn2_var"],
                     p["conv2_b"])
    if p.get("match_w") is not None:
        wm = p["match_w"][:, :, 0, 0].T.astype(jnp.bfloat16)     # (Cin, Cout)
        bm = p["match_b"][None, :].astype(jnp.float32)
    else:  # nn.Identity() when in_channels == out_channels
        wm = jnp.eye(Cin, dtype=jnp.bfloat16)
        bm = jnp.zeros((1, Cin), jnp.float32)
    w1 = p["se_fc1_w"][:, :, 0, 0].T.astype(jnp.float32)         # (Cout, Cr)
    w2 = p["se_fc2_w"][:, :, 0, 0].T.astype(jnp.float32)         # (Cr, Cout)

    y = conv2_se_call(a, xb, mask2, tap_weights_cat(p["conv2_w"]), s2, t2,
                      wm, bm, w1, p["se_fc1_b"][None, :].astype(jnp.float32),
                      w2, p["se_fc2_b"][None, :].astype(jnp.float32), H=H, W=W)

    y = y.reshape(N, H, Wp, Cout)[:, :, :W, :]      # drop the 2 garbage columns
    return jnp.transpose(y, (0, 3, 1, 2))           # back to NCHW


# ---------------------------------------------------------------------------
# Pure-JAX reference for validation
# ---------------------------------------------------------------------------
def _conv(x, w, b, pad):
    dn = ("NCHW", "OIHW", "NCHW")
    y = lax.conv_general_dilated(x, w, (1, 1), padding=((pad, pad), (pad, pad)),
                                 dimension_numbers=dn)
    return y + b[None, :, None, None]


def _bn(z, g, bt, m, v):
    return (g[None, :, None, None] * (z - m[None, :, None, None])
            * lax.rsqrt(v + EPS)[None, :, None, None] + bt[None, :, None, None])


def reference_forward(x, p):
    identity = _conv(x, p["match_w"], p["match_b"], 0)
    out = jax.nn.relu(_bn(_conv(x, p["conv1_w"], p["conv1_b"], 1),
                          p["bn1_gamma"], p["bn1_beta"], p["bn1_mean"], p["bn1_var"]))
    out = _bn(_conv(out, p["conv2_w"], p["conv2_b"], 1),
              p["bn2_gamma"], p["bn2_beta"], p["bn2_mean"], p["bn2_var"])
    pooled = jnp.mean(out, axis=(2, 3))                               # (N, C)
    h = jax.nn.relu(jnp.einsum("rc,nc->nr", p["se_fc1_w"][:, :, 0, 0], pooled)
                    + p["se_fc1_b"][None, :])
    s = jax.nn.sigmoid(jnp.einsum("cr,nr->nc", p["se_fc2_w"][:, :, 0, 0], h)
                       + p["se_fc2_b"][None, :])
    out = out * s[:, :, None, None]
    return jax.nn.relu(out + identity)


# ---------------------------------------------------------------------------
# Deterministic parameter construction + demo
# ---------------------------------------------------------------------------
def make_params(key, cin, cout, reduction=16):
    cr = cout // reduction
    ks = jax.random.split(key, 20)
    n = lambda k, s, sc=0.1: sc * jax.random.normal(k, s, jnp.float32)
    u = lambda k, s: jax.random.uniform(k, s, jnp.float32, 0.5, 1.5)
    return dict(
        conv1_w=n(ks[0], (cout, cin, 3, 3)), conv1_b=n(ks[1], (cout,)),
        bn1_gamma=u(ks[2], (cout,)), bn1_beta=n(ks[3], (cout,)),
        bn1_mean=n(ks[4], (cout,)), bn1_var=u(ks[5], (cout,)),
        conv2_w=n(ks[6], (cout, cout, 3, 3)), conv2_b=n(ks[7], (cout,)),
        bn2_gamma=u(ks[8], (cout,)), bn2_beta=n(ks[9], (cout,)),
        bn2_mean=n(ks[10], (cout,)), bn2_var=u(ks[11], (cout,)),
        se_fc1_w=n(ks[12], (cr, cout, 1, 1)), se_fc1_b=n(ks[13], (cr,)),
        se_fc2_w=n(ks[14], (cout, cr, 1, 1)), se_fc2_b=n(ks[15], (cout,)),
        match_w=n(ks[16], (cout, cin, 1, 1)), match_b=n(ks[17], (cout,)),
    )


if __name__ == "__main__":
    N, Cin, Cout, H, W = 2, 16, 32, 8, 8   # Cout=32 so SE reduction 32//16=2 is valid
    key = jax.random.PRNGKey(0)
    kx, kp = jax.random.split(key)
    x = jax.random.normal(kx, (N, Cin, H, W), jnp.float32)
    params = make_params(kp, Cin, Cout)

    y = jax.block_until_ready(jax.jit(residual_block_forward)(x, params))
    y_ref = jax.block_until_ready(reference_forward(x, params))

    assert y.shape == (N, Cout, H, W), y.shape
    max_err = float(jnp.max(jnp.abs(y - y_ref)))
    # tolerance accounts for bf16 matmul inputs (f32 accumulation)
    assert jnp.allclose(y, y_ref, rtol=2e-2, atol=3e-2), max_err
    print("KERNEL_OK")
</pallas_src>

<mosaic_0001>
module attributes {stable_mosaic.version = 11 : i64} {
  func.func @conv3x3_bn_relu_kernel(%arg0: i32, %arg1: memref<1x140x16xf32, #tpu.memory_space<vmem>>, %arg2: memref<110x1xf32, #tpu.memory_space<vmem>>, %arg3: memref<144x32xbf16, #tpu.memory_space<vmem>>, %arg4: memref<1x32xf32, #tpu.memory_space<vmem>>, %arg5: memref<1x32xf32, #tpu.memory_space<vmem>>, %arg6: memref<1x110x32xf32, #tpu.memory_space<vmem>>) attributes {dimension_semantics = [#tpu.dimension_semantics<parallel>], iteration_bounds = array<i64: 2>, scalar_prefetch = 0 : i64, scratch_operands = 0 : i64, tpu.core_type = #tpu.core_type<tc>, window_params = [{transform_indices = @transform_0, window_bounds = array<i64: 1, 140, 16>}, {pipeline_mode = #tpu.pipeline_mode<synchronous>, transform_indices = @transform_1, window_bounds = array<i64: 110, 1>}, {pipeline_mode = #tpu.pipeline_mode<synchronous>, transform_indices = @transform_2, window_bounds = array<i64: 144, 32>}, {pipeline_mode = #tpu.pipeline_mode<synchronous>, transform_indices = @transform_3, window_bounds = array<i64: 1, 32>}, {pipeline_mode = #tpu.pipeline_mode<synchronous>, transform_indices = @transform_4, window_bounds = array<i64: 1, 32>}, {transform_indices = @transform_5, window_bounds = array<i64: 1, 110, 32>}]} {
    %c0 = arith.constant 0 : index
    %c0_0 = arith.constant 0 : index
    %c0_1 = arith.constant 0 : index
    %0 = vector.load %arg1[%c0, %c0_0, %c0_1] : memref<1x140x16xf32, #tpu.memory_space<vmem>>, vector<1x110x16xf32>
    %1 = vector.shape_cast %0 : vector<1x110x16xf32> to vector<110x16xf32>
    %c0_2 = arith.constant 0 : index
    %c1 = arith.constant 1 : index
    %c0_3 = arith.constant 0 : index
    %2 = vector.load %arg1[%c0_2, %c1, %c0_3] : memref<1x140x16xf32, #tpu.memory_space<vmem>>, vector<1x110x16xf32>
    %3 = vector.shape_cast %2 : vector<1x110x16xf32> to vector<110x16xf32>
    %c0_4 = arith.constant 0 : index
    %c2 = arith.constant 2 : index
    %c0_5 = arith.constant 0 : index
    %4 = vector.load %arg1[%c0_4, %c2, %c0_5] : memref<1x140x16xf32, #tpu.memory_space<vmem>>, vector<1x110x16xf32>
    %5 = vector.shape_cast %4 : vector<1x110x16xf32> to vector<110x16xf32>
    %c0_6 = arith.constant 0 : index
    %c10 = arith.constant 10 : index
    %c0_7 = arith.constant 0 : index
    %6 = vector.load %arg1[%c0_6, %c10, %c0_7] : memref<1x140x16xf32, #tpu.memory_space<vmem>>, vector<1x110x16xf32>
    %7 = vector.shape_cast %6 : vector<1x110x16xf32> to vector<110x16xf32>
    %c0_8 = arith.constant 0 : index
    %c11 = arith.constant 11 : index
    %c0_9 = arith.constant 0 : index
    %8 = vector.load %arg1[%c0_8, %c11, %c0_9] : memref<1x140x16xf32, #tpu.memory_space<vmem>>, vector<1x110x16xf32>
    %9 = vector.shape_cast %8 : vector<1x110x16xf32> to vector<110x16xf32>
    %c0_10 = arith.constant 0 : index
    %c12 = arith.constant 12 : index
    %c0_11 = arith.constant 0 : index
    %10 = vector.load %arg1[%c0_10, %c12, %c0_11] : memref<1x140x16xf32, #tpu.memory_space<vmem>>, vector<1x110x16xf32>
    %11 = vector.shape_cast %10 : vector<1x110x16xf32> to vector<110x16xf32>
    %c0_12 = arith.constant 0 : index
    %c20 = arith.constant 20 : index
    %c0_13 = arith.constant 0 : index
    %12 = vector.load %arg1[%c0_12, %c20, %c0_13] : memref<1x140x16xf32, #tpu.memory_space<vmem>>, vector<1x110x16xf32>
    %13 = vector.shape_cast %12 : vector<1x110x16xf32> to vector<110x16xf32>
    %c0_14 = arith.constant 0 : index
    %c21 = arith.constant 21 : index
    %c0_15 = arith.constant 0 : index
    %14 = vector.load %arg1[%c0_14, %c21, %c0_15] : memref<1x140x16xf32, #tpu.memory_space<vmem>>, vector<1x110x16xf32>
    %15 = vector.shape_cast %14 : vector<1x110x16xf32> to vector<110x16xf32>
    %c0_16 = arith.constant 0 : index
    %c22 = arith.constant 22 : index
    %c0_17 = arith.constant 0 : index
    %16 = vector.load %arg1[%c0_16, %c22, %c0_17] : memref<1x140x16xf32, #tpu.memory_space<vmem>>, vector<1x110x16xf32>
    %17 = vector.shape_cast %16 : vector<1x110x16xf32> to vector<110x16xf32>
    %18 = tpu.concatenate %1, %3, %5, %7, %9, %11, %13, %15, %17 in 1 : vector<110x16xf32>, vector<110x16xf32>, vector<110x16xf32>, vector<110x16xf32>, vector<110x16xf32>, vector<110x16xf32>, vector<110x16xf32>, vector<110x16xf32>, vector<110x16xf32> -> vector<110x144xf32>
    %19 = arith.truncf %18 : vector<110x144xf32> to vector<110x144xbf16>
    %c0_18 = arith.constant 0 : index
    %c0_19 = arith.constant 0 : index
    %20 = vector.load %arg3[%c0_18, %c0_19] : memref<144x32xbf16, #tpu.memory_space<vmem>>, vector<144x32xbf16>
    %cst = arith.constant dense<0.000000e+00> : vector<110x32xf32>
    %21 = tpu.matmul %19, %20, %cst {dimension_numbers = #tpu.dot_dimension_numbers<[1], [0], [0], [1], [0, 0, 1, 1], [], []>} : vector<110x144xbf16>, vector<144x32xbf16>, vector<110x32xf32> -> vector<110x32xf32>
    %c0_20 = arith.constant 0 : index
    %c0_21 = arith.constant 0 : index
    %22 = vector.load %arg4[%c0_20, %c0_21] : memref<1x32xf32, #tpu.memory_space<vmem>>, vector<1x32xf32>
    %23 = vector.broadcast %22 : vector<1x32xf32> to vector<110x32xf32>
    %24 = arith.mulf %21, %23 : vector<110x32xf32>
    %c0_22 = arith.constant 0 : index
    %c0_23 = arith.constant 0 : index
    %25 = vector.load %arg5[%c0_22, %c0_23] : memref<1x32xf32, #tpu.memory_space<vmem>>, vector<1x32xf32>
    %26 = vector.broadcast %25 : vector<1x32xf32> to vector<110x32xf32>
    %27 = arith.addf %24, %26 : vector<110x32xf32>
    %cst_24 = arith.constant 0.000000e+00 : f32
    %28 = vector.broadcast %cst_24 : f32 to vector<110x32xf32>
    %29 = arith.maximumf %27, %28 : vector<110x32xf32>
    %c0_25 = arith.constant 0 : index
    %c0_26 = arith.constant 0 : index
    %30 = vector.load %arg2[%c0_25, %c0_26] : memref<110x1xf32, #tpu.memory_space<vmem>>, vector<110x1xf32>
    %31 = vector.broadcast %30 : vector<110x1xf32> to vector<110x32xf32>
    %32 = arith.mulf %29, %31 : vector<110x32xf32>
    %c0_27 = arith.constant 0 : index
    %c0_28 = arith.constant 0 : index
    %c0_29 = arith.constant 0 : index
    %33 = vector.load %arg6[%c0_27, %c0_28, %c0_29] : memref<1x110x32xf32, #tpu.memory_space<vmem>>, vector<1x110x32xf32>
    %34 = vector.shape_cast %33 : vector<1x110x32xf32> to vector<110x32xf32>
    %35 = vector.shape_cast %32 : vector<110x32xf32> to vector<1x110x32xf32>
    tpu.vector_store %arg6[%c0_27, %c0_28, %c0_29], %35 {strides = array<i32>} : memref<1x110x32xf32, #tpu.memory_space<vmem>>, vector<1x110x32xf32>,
    return
  }
  func.func @transform_0(%arg0: i32) -> (i32, i32, i32) {
    %c0_i32 = arith.constant 0 : i32
    %c0_i32_0 = arith.constant 0 : i32
    %c0_i32_1 = arith.constant 0 : i32
    return %arg0, %c0_i32, %c0_i32_0 : i32, i32, i32
  }
  func.func @transform_1(%arg0: i32) -> (i32, i32) {
    %c0_i32 = arith.constant 0 : i32
    %c0_i32_0 = arith.constant 0 : i32
    %c0_i32_1 = arith.constant 0 : i32
    return %c0_i32, %c0_i32_0 : i32, i32
  }
  func.func @transform_2(%arg0: i32) -> (i32, i32) {
    %c0_i32 = arith.constant 0 : i32
    %c0_i32_0 = arith.constant 0 : i32
    %c0_i32_1 = arith.constant 0 : i32
    return %c0_i32, %c0_i32_0 : i32, i32
  }
  func.func @transform_3(%arg0: i32) -> (i32, i32) {
    %c0_i32 = arith.constant 0 : i32
    %c0_i32_0 = arith.constant 0 : i32
    %c0_i32_1 = arith.constant 0 : i32
    return %c0_i32, %c0_i32_0 : i32, i32
  }
  func.func @transform_4(%arg0: i32) -> (i32, i32) {
    %c0_i32 = arith.constant 0 : i32
    %c0_i32_0 = arith.constant 0 : i32
    %c0_i32_1 = arith.constant 0 : i32
    return %c0_i32, %c0_i32_0 : i32, i32
  }
  func.func @transform_5(%arg0: i32) -> (i32, i32, i32) {
    %c0_i32 = arith.constant 0 : i32
    %c0_i32_0 = arith.constant 0 : i32
    %c0_i32_1 = arith.constant 0 : i32
    return %arg0, %c0_i32, %c0_i32_0 : i32, i32, i32
  }
}

module attributes {stable_mosaic.version = 11 : i64} {
  func.func @conv2_se_residual_kernel(%arg0: i32, %arg1: memref<1x110x32xf32, #tpu.memory_space<vmem>>, %arg2: memref<1x140x16xf32, #tpu.memory_space<vmem>>, %arg3: memref<80x1xf32, #tpu.memory_space<vmem>>, %arg4: memref<288x32xbf16, #tpu.memory_space<vmem>>, %arg5: memref<1x32xf32, #tpu.memory_space<vmem>>, %arg6: memref<1x32xf32, #tpu.memory_space<vmem>>, %arg7: memref<16x32xbf16, #tpu.memory_space<vmem>>, %arg8: memref<1x32xf32, #tpu.memory_space<vmem>>, %arg9: memref<32x2xf32, #tpu.memory_space<vmem>>, %arg10: memref<1x2xf32, #tpu.memory_space<vmem>>, %arg11: memref<2x32xf32, #tpu.memory_space<vmem>>, %arg12: memref<1x32xf32, #tpu.memory_space<vmem>>, %arg13: memref<1x80x32xf32, #tpu.memory_space<vmem>>) attributes {dimension_semantics = [#tpu.dimension_semantics<parallel>], iteration_bounds = array<i64: 2>, scalar_prefetch = 0 : i64, scratch_operands = 0 : i64, tpu.core_type = #tpu.core_type<tc>, window_params = [{transform_indices = @transform_0, window_bounds = array<i64: 1, 110, 32>}, {transform_indices = @transform_1, window_bounds = array<i64: 1, 140, 16>}, {pipeline_mode = #tpu.pipeline_mode<synchronous>, transform_indices = @transform_2, window_bounds = array<i64: 80, 1>}, {pipeline_mode = #tpu.pipeline_mode<synchronous>, transform_indices = @transform_3, window_bounds = array<i64: 288, 32>}, {pipeline_mode = #tpu.pipeline_mode<synchronous>, transform_indices = @transform_4, window_bounds = array<i64: 1, 32>}, {pipeline_mode = #tpu.pipeline_mode<synchronous>, transform_indices = @transform_5, window_bounds = array<i64: 1, 32>}, {pipeline_mode = #tpu.pipeline_mode<synchronous>, transform_indices = @transform_6, window_bounds = array<i64: 16, 32>}, {pipeline_mode = #tpu.pipeline_mode<synchronous>, transform_indices = @transform_7, window_bounds = array<i64: 1, 32>}, {pipeline_mode = #tpu.pipeline_mode<synchronous>, transform_indices = @transform_8, window_bounds = array<i64: 32, 2>}, {pipeline_mode = #tpu.pipeline_mode<synchronous>, transform_indices = @transform_9, window_bounds = array<i64: 1, 2>}, {pipeline_mode = #tpu.pipeline_mode<synchronous>, transform_indices = @transform_10, window_bounds = array<i64: 2, 32>}, {pipeline_mode = #tpu.pipeline_mode<synchronous>, transform_indices = @transform_11, window_bounds = array<i64: 1, 32>}, {transform_indices = @transform_12, window_bounds = array<i64: 1, 80, 32>}]} {
    %c0 = arith.constant 0 : index
    %c0_0 = arith.constant 0 : index
    %c0_1 = arith.constant 0 : index
    %0 = vector.load %arg1[%c0, %c0_0, %c0_1] : memref<1x110x32xf32, #tpu.memory_space<vmem>>, vector<1x80x32xf32>
    %1 = vector.shape_cast %0 : vector<1x80x32xf32> to vector<80x32xf32>
    %c0_2 = arith.constant 0 : index
    %c1 = arith.constant 1 : index
    %c0_3 = arith.constant 0 : index
    %2 = vector.load %arg1[%c0_2, %c1, %c0_3] : memref<1x110x32xf32, #tpu.memory_space<vmem>>, vector<1x80x32xf32>
    %3 = vector.shape_cast %2 : vector<1x80x32xf32> to vector<80x32xf32>
    %c0_4 = arith.constant 0 : index
    %c2 = arith.constant 2 : index
    %c0_5 = arith.constant 0 : index
    %4 = vector.load %arg1[%c0_4, %c2, %c0_5] : memref<1x110x32xf32, #tpu.memory_space<vmem>>, vector<1x80x32xf32>
    %5 = vector.shape_cast %4 : vector<1x80x32xf32> to vector<80x32xf32>
    %c0_6 = arith.constant 0 : index
    %c10 = arith.constant 10 : index
    %c0_7 = arith.constant 0 : index
    %6 = vector.load %arg1[%c0_6, %c10, %c0_7] : memref<1x110x32xf32, #tpu.memory_space<vmem>>, vector<1x80x32xf32>
    %7 = vector.shape_cast %6 : vector<1x80x32xf32> to vector<80x32xf32>
    %c0_8 = arith.constant 0 : index
    %c11 = arith.constant 11 : index
    %c0_9 = arith.constant 0 : index
    %8 = vector.load %arg1[%c0_8, %c11, %c0_9] : memref<1x110x32xf32, #tpu.memory_space<vmem>>, vector<1x80x32xf32>
    %9 = vector.shape_cast %8 : vector<1x80x32xf32> to vector<80x32xf32>
    %c0_10 = arith.constant 0 : index
    %c12 = arith.constant 12 : index
    %c0_11 = arith.constant 0 : index
    %10 = vector.load %arg1[%c0_10, %c12, %c0_11] : memref<1x110x32xf32, #tpu.memory_space<vmem>>, vector<1x80x32xf32>
    %11 = vector.shape_cast %10 : vector<1x80x32xf32> to vector<80x32xf32>
    %c0_12 = arith.constant 0 : index
    %c20 = arith.constant 20 : index
    %c0_13 = arith.constant 0 : index
    %12 = vector.load %arg1[%c0_12, %c20, %c0_13] : memref<1x110x32xf32, #tpu.memory_space<vmem>>, vector<1x80x32xf32>
    %13 = vector.shape_cast %12 : vector<1x80x32xf32> to vector<80x32xf32>
    %c0_14 = arith.constant 0 : index
    %c21 = arith.constant 21 : index
    %c0_15 = arith.constant 0 : index
    %14 = vector.load %arg1[%c0_14, %c21, %c0_15] : memref<1x110x32xf32, #tpu.memory_space<vmem>>, vector<1x80x32xf32>
    %15 = vector.shape_cast %14 : vector<1x80x32xf32> to vector<80x32xf32>
    %c0_16 = arith.constant 0 : index
    %c22 = arith.constant 22 : index
    %c0_17 = arith.constant 0 : index
    %16 = vector.load %arg1[%c0_16, %c22, %c0_17] : memref<1x110x32xf32, #tpu.memory_space<vmem>>, vector<1x80x32xf32>
    %17 = vector.shape_cast %16 : vector<1x80x32xf32> to vector<80x32xf32>
    %18 = tpu.concatenate %1, %3, %5, %7, %9, %11, %13, %15, %17 in 1 : vector<80x32xf32>, vector<80x32xf32>, vector<80x32xf32>, vector<80x32xf32>, vector<80x32xf32>, vector<80x32xf32>, vector<80x32xf32>, vector<80x32xf32>, vector<80x32xf32> -> vector<80x288xf32>
    %19 = arith.truncf %18 : vector<80x288xf32> to vector<80x288xbf16>
    %c0_18 = arith.constant 0 : index
    %c0_19 = arith.constant 0 : index
    %20 = vector.load %arg4[%c0_18, %c0_19] : memref<288x32xbf16, #tpu.memory_space<vmem>>, vector<288x32xbf16>
    %cst = arith.constant dense<0.000000e+00> : vector<80x32xf32>
    %21 = tpu.matmul %19, %20, %cst {dimension_numbers = #tpu.dot_dimension_numbers<[1], [0], [0], [1], [0, 0, 1, 1], [], []>} : vector<80x288xbf16>, vector<288x32xbf16>, vector<80x32xf32> -> vector<80x32xf32>
    %c0_20 = arith.constant 0 : index
    %c0_21 = arith.constant 0 : index
    %22 = vector.load %arg5[%c0_20, %c0_21] : memref<1x32xf32, #tpu.memory_space<vmem>>, vector<1x32xf32>
    %23 = vector.broadcast %22 : vector<1x32xf32> to vector<80x32xf32>
    %24 = arith.mulf %21, %23 : vector<80x32xf32>
    %c0_22 = arith.constant 0 : index
    %c0_23 = arith.constant 0 : index
    %25 = vector.load %arg6[%c0_22, %c0_23] : memref<1x32xf32, #tpu.memory_space<vmem>>, vector<1x32xf32>
    %26 = vector.broadcast %25 : vector<1x32xf32> to vector<80x32xf32>
    %27 = arith.addf %24, %26 : vector<80x32xf32>
    %c0_24 = arith.constant 0 : index
    %c0_25 = arith.constant 0 : index
    %28 = vector.load %arg3[%c0_24, %c0_25] : memref<80x1xf32, #tpu.memory_space<vmem>>, vector<80x1xf32>
    %29 = vector.broadcast %28 : vector<80x1xf32> to vector<80x32xf32>
    %30 = arith.mulf %27, %29 : vector<80x32xf32>
    %cst_26 = arith.constant dense<0.000000e+00> : vector<32xf32>
    %31 = vector.multi_reduction <add>, %30, %cst_26 [0] : vector<80x32xf32> to vector<32xf32>
    %32 = vector.shape_cast %31 : vector<32xf32> to vector<1x32xf32>
    %cst_27 = arith.constant 1.562500e-02 : f32
    %33 = vector.broadcast %cst_27 : f32 to vector<1x32xf32>
    %34 = arith.mulf %32, %33 : vector<1x32xf32>
    %c0_28 = arith.constant 0 : index
    %c0_29 = arith.constant 0 : index
    %35 = vector.load %arg9[%c0_28, %c0_29] : memref<32x2xf32, #tpu.memory_space<vmem>>, vector<32x2xf32>
    %cst_30 = arith.constant dense<0.000000e+00> : vector<1x2xf32>
    %36 = tpu.matmul %34, %35, %cst_30 {dimension_numbers = #tpu.dot_dimension_numbers<[1], [0], [0], [1], [0, 0, 1, 1], [], []>} : vector<1x32xf32>, vector<32x2xf32>, vector<1x2xf32> -> vector<1x2xf32>
    %c0_31 = arith.constant 0 : index
    %c0_32 = arith.constant 0 : index
    %37 = vector.load %arg10[%c0_31, %c0_32] : memref<1x2xf32, #tpu.memory_space<vmem>>, vector<1x2xf32>
    %38 = arith.addf %36, %37 : vector<1x2xf32>
    %cst_33 = arith.constant 0.000000e+00 : f32
    %39 = vector.broadcast %cst_33 : f32 to vector<1x2xf32>
    %40 = arith.maximumf %38, %39 : vector<1x2xf32>
    %c0_34 = arith.constant 0 : index
    %c0_35 = arith.constant 0 : index
    %41 = vector.load %arg11[%c0_34, %c0_35] : memref<2x32xf32, #tpu.memory_space<vmem>>, vector<2x32xf32>
    %cst_36 = arith.constant dense<0.000000e+00> : vector<1x32xf32>
    %42 = tpu.matmul %40, %41, %cst_36 {dimension_numbers = #tpu.dot_dimension_numbers<[1], [0], [0], [1], [0, 0, 1, 1], [], []>} : vector<1x2xf32>, vector<2x32xf32>, vector<1x32xf32> -> vector<1x32xf32>
    %c0_37 = arith.constant 0 : index
    %c0_38 = arith.constant 0 : index
    %43 = vector.load %arg12[%c0_37, %c0_38] : memref<1x32xf32, #tpu.memory_space<vmem>>, vector<1x32xf32>
    %44 = arith.addf %42, %43 : vector<1x32xf32>
    %45 = arith.negf %44 : vector<1x32xf32>
    %46 = math.exp %45 : vector<1x32xf32>
    %cst_39 = arith.constant 1.000000e+00 : f32
    %47 = vector.broadcast %cst_39 : f32 to vector<1x32xf32>
    %48 = arith.addf %47, %46 : vector<1x32xf32>
    %49 = arith.divf %47, %48 : vector<1x32xf32>
    %c0_40 = arith.constant 0 : index
    %c22_41 = arith.constant 22 : index
    %c0_42 = arith.constant 0 : index
    %50 = vector.load %arg2[%c0_40, %c22_41, %c0_42] : memref<1x140x16xf32, #tpu.memory_space<vmem>>, vector<1x80x16xf32>
    %51 = vector.shape_cast %50 : vector<1x80x16xf32> to vector<80x16xf32>
    %52 = arith.truncf %51 : vector<80x16xf32> to vector<80x16xbf16>
    %c0_43 = arith.constant 0 : index
    %c0_44 = arith.constant 0 : index
    %53 = vector.load %arg7[%c0_43, %c0_44] : memref<16x32xbf16, #tpu.memory_space<vmem>>, vector<16x32xbf16>
    %cst_45 = arith.constant dense<0.000000e+00> : vector<80x32xf32>
    %54 = tpu.matmul %52, %53, %cst_45 {dimension_numbers = #tpu.dot_dimension_numbers<[1], [0], [0], [1], [0, 0, 1, 1], [], []>} : vector<80x16xbf16>, vector<16x32xbf16>, vector<80x32xf32> -> vector<80x32xf32>
    %c0_46 = arith.constant 0 : index
    %c0_47 = arith.constant 0 : index
    %55 = vector.load %arg8[%c0_46, %c0_47] : memref<1x32xf32, #tpu.memory_space<vmem>>, vector<1x32xf32>
    %56 = vector.broadcast %55 : vector<1x32xf32> to vector<80x32xf32>
    %57 = arith.addf %54, %56 : vector<80x32xf32>
    %58 = vector.broadcast %49 : vector<1x32xf32> to vector<80x32xf32>
    %59 = arith.mulf %27, %58 : vector<80x32xf32>
    %60 = arith.addf %59, %57 : vector<80x32xf32>
    %cst_48 = arith.constant 0.000000e+00 : f32
    %61 = vector.broadcast %cst_48 : f32 to vector<80x32xf32>
    %62 = arith.maximumf %60, %61 : vector<80x32xf32>
    %c0_49 = arith.constant 0 : index
    %c0_50 = arith.constant 0 : index
    %c0_51 = arith.constant 0 : index
    %63 = vector.load %arg13[%c0_49, %c0_50, %c0_51] : memref<1x80x32xf32, #tpu.memory_space<vmem>>, vector<1x80x32xf32>
    %64 = vector.shape_cast %63 : vector<1x80x32xf32> to vector<80x32xf32>
    %65 = vector.shape_cast %62 : vector<80x32xf32> to vector<1x80x32xf32>
    tpu.vector_store %arg13[%c0_49, %c0_50, %c0_51], %65 {strides = array<i32>} : memref<1x80x32xf32, #tpu.memory_space<vmem>>, vector<1x80x32xf32>,
    return
  }
  func.func @transform_0(%arg0: i32) -> (i32, i32, i32) {
    %c0_i32 = arith.constant 0 : i32
    %c0_i32_0 = arith.constant 0 : i32
    %c0_i32_1 = arith.constant 0 : i32
    return %arg0, %c0_i32, %c0_i32_0 : i32, i32, i32
  }
  func.func @transform_1(%arg0: i32) -> (i32, i32, i32) {
    %c0_i32 = arith.constant 0 : i32
    %c0_i32_0 = arith.constant 0 : i32
    %c0_i32_1 = arith.constant 0 : i32
    return %arg0, %c0_i32, %c0_i32_0 : i32, i32, i32
  }
  func.func @transform_2(%arg0: i32) -> (i32, i32) {
    %c0_i32 = arith.constant 0 : i32
    %c0_i32_0 = arith.constant 0 : i32
    %c0_i32_1 = arith.constant 0 : i32
    return %c0_i32, %c0_i32_0 : i32, i32
  }
  func.func @transform_3(%arg0: i32) -> (i32, i32) {
    %c0_i32 = arith.constant 0 : i32
    %c0_i32_0 = arith.constant 0 : i32
    %c0_i32_1 = arith.constant 0 : i32
    return %c0_i32, %c0_i32_0 : i32, i32
  }
  func.func @transform_4(%arg0: i32) -> (i32, i32) {
    %c0_i32 = arith.constant 0 : i32
    %c0_i32_0 = arith.constant 0 : i32
    %c0_i32_1 = arith.constant 0 : i32
    return %c0_i32, %c0_i32_0 : i32, i32
  }
  func.func @transform_5(%arg0: i32) -> (i32, i32) {
    %c0_i32 = arith.constant 0 : i32
    %c0_i32_0 = arith.constant 0 : i32
    %c0_i32_1 = arith.constant 0 : i32
    return %c0_i32, %c0_i32_0 : i32, i32
  }
  func.func @transform_6(%arg0: i32) -> (i32, i32) {
    %c0_i32 = arith.constant 0 : i32
    %c0_i32_0 = arith.constant 0 : i32
    %c0_i32_1 = arith.constant 0 : i32
    return %c0_i32, %c0_i32_0 : i32, i32
  }
  func.func @transform_7(%arg0: i32) -> (i32, i32) {
    %c0_i32 = arith.constant 0 : i32
    %c0_i32_0 = arith.constant 0 : i32
    %c0_i32_1 = arith.constant 0 : i32
    return %c0_i32, %c0_i32_0 : i32, i32
  }
  func.func @transform_8(%arg0: i32) -> (i32, i32) {
    %c0_i32 = arith.constant 0 : i32
    %c0_i32_0 = arith.constant 0 : i32
    %c0_i32_1 = arith.constant 0 : i32
    return %c0_i32, %c0_i32_0 : i32, i32
  }
  func.func @transform_9(%arg0: i32) -> (i32, i32) {
    %c0_i32 = arith.constant 0 : i32
    %c0_i32_0 = arith.constant 0 : i32
    %c0_i32_1 = arith.constant 0 : i32
    return %c0_i32, %c0_i32_0 : i32, i32
  }
  func.func @transform_10(%arg0: i32) -> (i32, i32) {
    %c0_i32 = arith.constant 0 : i32
    %c0_i32_0 = arith.constant 0 : i32
    %c0_i32_1 = arith.constant 0 : i32
    return %c0_i32, %c0_i32_0 : i32, i32
  }
  func.func @transform_11(%arg0: i32) -> (i32, i32) {
    %c0_i32 = arith.constant 0 : i32
    %c0_i32_0 = arith.constant 0 : i32
    %c0_i32_1 = arith.constant 0 : i32
    return %c0_i32, %c0_i32_0 : i32, i32
  }
  func.func @transform_12(%arg0: i32) -> (i32, i32, i32) {
    %c0_i32 = arith.constant 0 : i32
    %c0_i32_0 = arith.constant 0 : i32
    %c0_i32_1 = arith.constant 0 : i32
    return %arg0, %c0_i32, %c0_i32_0 : i32, i32, i32
  }
}

</mosaic_0001>

<llo_original>
// kernel: residual_block_forward.3
$region0: #{residual_block_forward.3}
  #allocation0 [shape = 'u32[]', space=smem, size = 0x4, offset = 0x4, fixed_abs, tag = 'smem constant byte address 0x4 - core index']
  #allocation1 [shape = 'u32[72,128]{1,0:T(1,128)}', space=vmem, size = 0x9000, scoped, tag = 'internal scratch']
  %s0 = inlined_call_operand.vmem [shape: f32[2,110,32], index: 0, kind: input, shape index: {}]
  %s1 = inlined_call_operand.vmem [shape: f32[2,140,16], index: 1, kind: input, shape index: {}]
  %s2 = inlined_call_operand.vmem [shape: f32[80,1], index: 2, kind: input, shape index: {}]
  %s3 = inlined_call_operand.vmem [shape: bf16[288,32], index: 3, kind: input, shape index: {}]
  %s4 = inlined_call_operand.vmem [shape: f32[1,32], index: 4, kind: input, shape index: {}]
  %s5 = inlined_call_operand.vmem [shape: f32[1,32], index: 5, kind: input, shape index: {}]
  %s6 = inlined_call_operand.vmem [shape: bf16[16,32], index: 6, kind: input, shape index: {}]
  %s7 = inlined_call_operand.vmem [shape: f32[1,32], index: 7, kind: input, shape index: {}]
  %s8 = inlined_call_operand.vmem [shape: f32[32,2], index: 8, kind: input, shape index: {}]
  %s9 = inlined_call_operand.vmem [shape: f32[1,2], index: 9, kind: input, shape index: {}]
  %s10 = inlined_call_operand.vmem [shape: f32[2,32], index: 10, kind: input, shape index: {}]
  %s11 = inlined_call_operand.vmem [shape: f32[1,32], index: 11, kind: input, shape index: {}]
  %s12 = inlined_call_operand.vmem [shape: f32[2,80,32], index: 12, kind: output, shape index: {}]
  %s13 = sld [smem:[#allocation0]]
  $region81: #{residual_block_forward.3} parent=0
    _
  %s15 = ssub.s32 1, %s13
  %s16 = scalar_select 0, %s15, %s13
  loop: start=0, step=1, limit=4
  $region2: #{residual_block_forward.3} parent=0 // loop_pre_header
    _
  $region3: #{residual_block_forward.3} parent=0 // loop_header
    %s18 = sphi 0, %s22
    %p19 = scmp.ge.s32.totalorder %s18, 4
    %s28 = sphi 0, %s30
    %s31 = sphi 0, %s28
    %s32 = sphi 0, %s31
    %s48 = sphi 0, %s32
    %s54 = sphi 0, %s56
    %s57 = sphi 0, %s54
    %s58 = sphi 0, %s57
    %s74 = sphi 0, %s58
    %s78 = sphi 0, %s78
    %s80 = sphi 0, %s78
    %s81 = sphi 0, %s80
    %s95 = sphi 0, %s81
    %s99 = sphi 0, %s99
    %s101 = sphi 0, %s99
    %s102 = sphi 0, %s101
    %s116 = sphi 0, %s102
    %s120 = sphi 0, %s120
    %s122 = sphi 0, %s120
    %s123 = sphi 0, %s122
    %s137 = sphi 0, %s123
    %s141 = sphi 0, %s141
    %s143 = sphi 0, %s141
    %s144 = sphi 0, %s143
    %s158 = sphi 0, %s144
    %s162 = sphi 0, %s162
    %s164 = sphi 0, %s162
    %s165 = sphi 0, %s164
    %s179 = sphi 0, %s165
    %s183 = sphi 0, %s183
    %s185 = sphi 0, %s183
    %s186 = sphi 0, %s185
    %s200 = sphi 0, %s186
    %s204 = sphi 0, %s204
    %s206 = sphi 0, %s204
    %s207 = sphi 0, %s206
    %s221 = sphi 0, %s207
    %s225 = sphi 0, %s225
    %s227 = sphi 0, %s225
    %s228 = sphi 0, %s227
    %s242 = sphi 0, %s228
    %s246 = sphi 0, %s246
    %s248 = sphi 0, %s246
    %s249 = sphi 0, %s248
    %s263 = sphi 0, %s249
    %s267 = sphi 0, %s267
    %s269 = sphi 0, %s267
    %s270 = sphi 0, %s269
    %s284 = sphi 0, %s270
    %s290 = sphi 0, %s292
    %s293 = sphi 0, %s290
    %s294 = sphi 0, %s293
    %s310 = sphi 0, %s294
  $region4: #{residual_block_forward.3} parent=0 // loop_header_branch
    %21 = sbr.rel (%p19) target = $region8
  $region5: #{residual_block_forward.3} parent=0 // loop_body
    %s23 = ssub.s32 %s18, 1
    %s24 = ssub.s32 %s18, 2
    %s25 = sadd.s32 %s18, 1
    %s26 = ssub.s32 %s18, %s25
    %p27 = scmp.eq.s32.totalorder %s26, 0
    %s29 = sadd.s32 %s28, 1
    %s30 = scalar_select %p27, %s28, %s29
    %p33 = pneg %p27
    %p34 = scmp.eq.s32.totalorder %s18, 1
    %p35 = por %p33, %p34
    %p36 = scmp.ne.s32.totalorder %s28, %s31
    %p37 = scmp.eq.s32.totalorder %s18, 0
    %p38 = por %p36, %p37
    %p39 = scmp.ne.s32.totalorder %s28, %s31
    %p40 = scmp.eq.s32.totalorder %s23, 1
    %p41 = por %p39, %p40
    %p42 = scmp.ne.s32.totalorder %s31, %s32
    %p43 = scmp.eq.s32.totalorder %s23, 0
    %p44 = por %p42, %p43
    %p45 = scmp.ne.s32.totalorder %s31, %s32
    %p46 = scmp.eq.s32.totalorder %s24, 1
    %p47 = por %p45, %p46
    %p49 = scmp.ne.s32.totalorder %s32, %s48
    %p50 = scmp.eq.s32.totalorder %s24, 0
    %p51 = por %p49, %p50
    %s52 = ssub.s32 %s18, %s25
    %p53 = scmp.eq.s32.totalorder %s52, 0
    %s55 = sadd.s32 %s54, 1
    %s56 = scalar_select %p53, %s54, %s55
    %p59 = pneg %p53
    %p60 = scmp.eq.s32.totalorder %s18, 1
    %p61 = por %p59, %p60
    %p62 = scmp.ne.s32.totalorder %s54, %s57
    %p63 = scmp.eq.s32.totalorder %s18, 0
    %p64 = por %p62, %p63
    %p65 = scmp.ne.s32.totalorder %s54, %s57
    %p66 = scmp.eq.s32.totalorder %s23, 1
    %p67 = por %p65, %p66
    %p68 = scmp.ne.s32.totalorder %s57, %s58
    %p69 = scmp.eq.s32.totalorder %s23, 0
    %p70 = por %p68, %p69
    %p71 = scmp.ne.s32.totalorder %s57, %s58
    %p72 = scmp.eq.s32.totalorder %s24, 1
    %p73 = por %p71, %p72
    %p75 = scmp.ne.s32.totalorder %s58, %s74
    %p76 = scmp.eq.s32.totalorder %s24, 0
    %p77 = por %p75, %p76
    %s79 = sadd.s32 %s78, 1
    %p82 = scmp.eq.s32.totalorder %s18, 1
    %p83 = scmp.ne.s32.totalorder %s78, %s80
    %p84 = scmp.eq.s32.totalorder %s18, 0
    %p85 = por %p83, %p84
    %p86 = scmp.ne.s32.totalorder %s78, %s80
    %p87 = scmp.eq.s32.totalorder %s23, 1
    %p88 = por %p86, %p87
    %p89 = scmp.ne.s32.totalorder %s80, %s81
    %p90 = scmp.eq.s32.totalorder %s23, 0
    %p91 = por %p89, %p90
    %p92 = scmp.ne.s32.totalorder %s80, %s81
    %p93 = scmp.eq.s32.totalorder %s24, 1
    %p94 = por %p92, %p93
    %p96 = scmp.ne.s32.totalorder %s81, %s95
    %p97 = scmp.eq.s32.totalorder %s24, 0
    %p98 = por %p96, %p97
    %s100 = sadd.s32 %s99, 1
    %p103 = scmp.eq.s32.totalorder %s18, 1
    %p104 = scmp.ne.s32.totalorder %s99, %s101
    %p105 = scmp.eq.s32.totalorder %s18, 0
    %p106 = por %p104, %p105
    %p107 = scmp.ne.s32.totalorder %s99, %s101
    %p108 = scmp.eq.s32.totalorder %s23, 1
    %p109 = por %p107, %p108
    %p110 = scmp.ne.s32.totalorder %s101, %s102
    %p111 = scmp.eq.s32.totalorder %s23, 0
    %p112 = por %p110, %p111
    %p113 = scmp.ne.s32.totalorder %s101, %s102
    %p114 = scmp.eq.s32.totalorder %s24, 1
    %p115 = por %p113, %p114
    %p117 = scmp.ne.s32.totalorder %s102, %s116
    %p118 = scmp.eq.s32.totalorder %s24, 0
    %p119 = por %p117, %p118
    %s121 = sadd.s32 %s120, 1
    %p124 = scmp.eq.s32.totalorder %s18, 1
    %p125 = scmp.ne.s32.totalorder %s120, %s122
    %p126 = scmp.eq.s32.totalorder %s18, 0
    %p127 = por %p125, %p126
    %p128 = scmp.ne.s32.totalorder %s120, %s122
    %p129 = scmp.eq.s32.totalorder %s23, 1
    %p130 = por %p128, %p129
    %p131 = scmp.ne.s32.totalorder %s122, %s123
    %p132 = scmp.eq.s32.totalorder %s23, 0
    %p133 = por %p131, %p132
    %p134 = scmp.ne.s32.totalorder %s122, %s123
    %p135 = scmp.eq.s32.totalorder %s24, 1
    %p136 = por %p134, %p135
    %p138 = scmp.ne.s32.totalorder %s123, %s137
    %p139 = scmp.eq.s32.totalorder %s24, 0
    %p140 = por %p138, %p139
    %s142 = sadd.s32 %s141, 1
    %p145 = scmp.eq.s32.totalorder %s18, 1
    %p146 = scmp.ne.s32.totalorder %s141, %s143
    %p147 = scmp.eq.s32.totalorder %s18, 0
    %p148 = por %p146, %p147
    %p149 = scmp.ne.s32.totalorder %s141, %s143
    %p150 = scmp.eq.s32.totalorder %s23, 1
    %p151 = por %p149, %p150
    %p152 = scmp.ne.s32.totalorder %s143, %s144
    %p153 = scmp.eq.s32.totalorder %s23, 0
    %p154 = por %p152, %p153
    %p155 = scmp.ne.s32.totalorder %s143, %s144
    %p156 = scmp.eq.s32.totalorder %s24, 1
    %p157 = por %p155, %p156
    %p159 = scmp.ne.s32.totalorder %s144, %s158
    %p160 = scmp.eq.s32.totalorder %s24, 0
    %p161 = por %p159, %p160
    %s163 = sadd.s32 %s162, 1
    %p166 = scmp.eq.s32.totalorder %s18, 1
    %p167 = scmp.ne.s32.totalorder %s162, %s164
    %p168 = scmp.eq.s32.totalorder %s18, 0
    %p169 = por %p167, %p168
    %p170 = scmp.ne.s32.totalorder %s162, %s164
    %p171 = scmp.eq.s32.totalorder %s23, 1
    %p172 = por %p170, %p171
    %p173 = scmp.ne.s32.totalorder %s164, %s165
    %p174 = scmp.eq.s32.totalorder %s23, 0
    %p175 = por %p173, %p174
    %p176 = scmp.ne.s32.totalorder %s164, %s165
    %p177 = scmp.eq.s32.totalorder %s24, 1
    %p178 = por %p176, %p177
    %p180 = scmp.ne.s32.totalorder %s165, %s179
    %p181 = scmp.eq.s32.totalorder %s24, 0
    %p182 = por %p180, %p181
    %s184 = sadd.s32 %s183, 1
    %p187 = scmp.eq.s32.totalorder %s18, 1
    %p188 = scmp.ne.s32.totalorder %s183, %s185
    %p189 = scmp.eq.s32.totalorder %s18, 0
    %p190 = por %p188, %p189
    %p191 = scmp.ne.s32.totalorder %s183, %s185
    %p192 = scmp.eq.s32.totalorder %s23, 1
    %p193 = por %p191, %p192
    %p194 = scmp.ne.s32.totalorder %s185, %s186
    %p195 = scmp.eq.s32.totalorder %s23, 0
    %p196 = por %p194, %p195
    %p197 = scmp.ne.s32.totalorder %s185, %s186
    %p198 = scmp.eq.s32.totalorder %s24, 1
    %p199 = por %p197, %p198
    %p201 = scmp.ne.s32.totalorder %s186, %s200
    %p202 = scmp.eq.s32.totalorder %s24, 0
    %p203 = por %p201, %p202
    %s205 = sadd.s32 %s204, 1
    %p208 = scmp.eq.s32.totalorder %s18, 1
    %p209 = scmp.ne.s32.totalorder %s204, %s206
    %p210 = scmp.eq.s32.totalorder %s18, 0
    %p211 = por %p209, %p210
    %p212 = scmp.ne.s32.totalorder %s204, %s206
    %p213 = scmp.eq.s32.totalorder %s23, 1
    %p214 = por %p212, %p213
    %p215 = scmp.ne.s32.totalorder %s206, %s207
    %p216 = scmp.eq.s32.totalorder %s23, 0
    %p217 = por %p215, %p216
    %p218 = scmp.ne.s32.totalorder %s206, %s207
    %p219 = scmp.eq.s32.totalorder %s24, 1
    %p220 = por %p218, %p219
    %p222 = scmp.ne.s32.totalorder %s207, %s221
    %p223 = scmp.eq.s32.totalorder %s24, 0
    %p224 = por %p222, %p223
    %s226 = sadd.s32 %s225, 1
    %p229 = scmp.eq.s32.totalorder %s18, 1
    %p230 = scmp.ne.s32.totalorder %s225, %s227
    %p231 = scmp.eq.s32.totalorder %s18, 0
    %p232 = por %p230, %p231
    %p233 = scmp.ne.s32.totalorder %s225, %s227
    %p234 = scmp.eq.s32.totalorder %s23, 1
    %p235 = por %p233, %p234
    %p236 = scmp.ne.s32.totalorder %s227, %s228
    %p237 = scmp.eq.s32.totalorder %s23, 0
    %p238 = por %p236, %p237
    %p239 = scmp.ne.s32.totalorder %s227, %s228
    %p240 = scmp.eq.s32.totalorder %s24, 1
    %p241 = por %p239, %p240
    %p243 = scmp.ne.s32.totalorder %s228, %s242
    %p244 = scmp.eq.s32.totalorder %s24, 0
    %p245 = por %p243, %p244
    %s247 = sadd.s32 %s246, 1
    %p250 = scmp.eq.s32.totalorder %s18, 1
    %p251 = scmp.ne.s32.totalorder %s246, %s248
    %p252 = scmp.eq.s32.totalorder %s18, 0
    %p253 = por %p251, %p252
    %p254 = scmp.ne.s32.totalorder %s246, %s248
    %p255 = scmp.eq.s32.totalorder %s23, 1
    %p256 = por %p254, %p255
    %p257 = scmp.ne.s32.totalorder %s248, %s249
    %p258 = scmp.eq.s32.totalorder %s23, 0
    %p259 = por %p257, %p258
    %p260 = scmp.ne.s32.totalorder %s248, %s249
    %p261 = scmp.eq.s32.totalorder %s24, 1
    %p262 = por %p260, %p261
    %p264 = scmp.ne.s32.totalorder %s249, %s263
    %p265 = scmp.eq.s32.totalorder %s24, 0
    %p266 = por %p264, %p265
    %s268 = sadd.s32 %s267, 1
    %p271 = scmp.eq.s32.totalorder %s18, 1
    %p272 = scmp.ne.s32.totalorder %s267, %s269
    %p273 = scmp.eq.s32.totalorder %s18, 0
    %p274 = por %p272, %p273
    %p275 = scmp.ne.s32.totalorder %s267, %s269
    %p276 = scmp.eq.s32.totalorder %s23, 1
    %p277 = por %p275, %p276
    %p278 = scmp.ne.s32.totalorder %s269, %s270
    %p279 = scmp.eq.s32.totalorder %s23, 0
    %p280 = por %p278, %p279
    %p281 = scmp.ne.s32.totalorder %s269, %s270
    %p282 = scmp.eq.s32.totalorder %s24, 1
    %p283 = por %p281, %p282
    %p285 = scmp.ne.s32.totalorder %s270, %s284
    %p286 = scmp.eq.s32.totalorder %s24, 0
    %p287 = por %p285, %p286
    %s288 = ssub.s32 %s18, %s25
    %p289 = scmp.eq.s32.totalorder %s288, 0
    %s291 = sadd.s32 %s290, 1
    %s292 = scalar_select %p289, %s290, %s291
    %p295 = pneg %p289
    %p296 = scmp.eq.s32.totalorder %s18, 1
    %p297 = por %p295, %p296
    %p298 = scmp.ne.s32.totalorder %s290, %s293
    %p299 = scmp.eq.s32.totalorder %s18, 0
    %p300 = por %p298, %p299
    %p301 = scmp.ne.s32.totalorder %s290, %s293
    %p302 = scmp.eq.s32.totalorder %s23, 1
    %p303 = por %p301, %p302
    %p304 = scmp.ne.s32.totalorder %s293, %s294
    %p305 = scmp.eq.s32.totalorder %s23, 0
    %p306 = por %p304, %p305
    %p307 = scmp.ne.s32.totalorder %s293, %s294
    %p308 = scmp.eq.s32.totalorder %s24, 1
    %p309 = por %p307, %p308
    %p311 = scmp.ne.s32.totalorder %s294, %s310
    %p312 = scmp.eq.s32.totalorder %s24, 0
    %p313 = por %p311, %p312
    %p314 = scmp.le.s32.totalorder 1, %s18
    %p315 = scmp.lt.s32.totalorder %s18, 3
    %p316 = pnand %p314, %p315
    %p317 = pneg %p316
    // Predicated region
    $region9: #{residual_block_forward.3} parent=5 // pred_check
      _
    $region10: #{residual_block_forward.3} parent=5 // pred_check_branch
      %319 = sbr.rel (%p316) target = $region12
    $region11: #{residual_block_forward.3} parent=5 // pred_region
      %s320 = ssub.s32 %s18, 1
      // Predicated region
      $region13: #{residual_block_forward.3} parent=11 // pred_check
        %p321 = pneg %p91
      $region14: #{residual_block_forward.3} parent=11 // pred_check_branch
        %323 = sbr.rel (%p321) target = $region16
      $region15: #{residual_block_forward.3} parent=11 // pred_region
        _
      $region16: #{residual_block_forward.3} parent=11 // pred_fallthru
        _
      // Predicated region
      $region17: #{residual_block_forward.3} parent=11 // pred_check
        %p324 = pneg %p112
      $region18: #{residual_block_forward.3} parent=11 // pred_check_branch
        %326 = sbr.rel (%p324) target = $region20
      $region19: #{residual_block_forward.3} parent=11 // pred_region
        _
      $region20: #{residual_block_forward.3} parent=11 // pred_fallthru
        _
      // Predicated region
      $region21: #{residual_block_forward.3} parent=11 // pred_check
        %p327 = pneg %p133
      $region22: #{residual_block_forward.3} parent=11 // pred_check_branch
        %329 = sbr.rel (%p327) target = $region24
      $region23: #{residual_block_forward.3} parent=11 // pred_region
        _
      $region24: #{residual_block_forward.3} parent=11 // pred_fallthru
        _
      // Predicated region
      $region25: #{residual_block_forward.3} parent=11 // pred_check
        %p330 = pneg %p154
      $region26: #{residual_block_forward.3} parent=11 // pred_check_branch
        %332 = sbr.rel (%p330) target = $region28
      $region27: #{residual_block_forward.3} parent=11 // pred_region
        _
      $region28: #{residual_block_forward.3} parent=11 // pred_fallthru
        _
      // Predicated region
      $region29: #{residual_block_forward.3} parent=11 // pred_check
        %p333 = pneg %p175
      $region30: #{residual_block_forward.3} parent=11 // pred_check_branch
        %335 = sbr.rel (%p333) target = $region32
      $region31: #{residual_block_forward.3} parent=11 // pred_region
        _
      $region32: #{residual_block_forward.3} parent=11 // pred_fallthru
        _
      // Predicated region
      $region33: #{residual_block_forward.3} parent=11 // pred_check
        %p336 = pneg %p196
      $region34: #{residual_block_forward.3} parent=11 // pred_check_branch
        %338 = sbr.rel (%p336) target = $region36
      $region35: #{residual_block_forward.3} parent=11 // pred_region
        _
      $region36: #{residual_block_forward.3} parent=11 // pred_fallthru
        _
      // Predicated region
      $region37: #{residual_block_forward.3} parent=11 // pred_check
        %p339 = pneg %p217
      $region38: #{residual_block_forward.3} parent=11 // pred_check_branch
        %341 = sbr.rel (%p339) target = $region40
      $region39: #{residual_block_forward.3} parent=11 // pred_region
        _
      $region40: #{residual_block_forward.3} parent=11 // pred_fallthru
        _
      // Predicated region
      $region41: #{residual_block_forward.3} parent=11 // pred_check
        %p342 = pneg %p238
      $region42: #{residual_block_forward.3} parent=11 // pred_check_branch
        %344 = sbr.rel (%p342) target = $region44
      $region43: #{residual_block_forward.3} parent=11 // pred_region
        _
      $region44: #{residual_block_forward.3} parent=11 // pred_fallthru
        _
      // Predicated region
      $region45: #{residual_block_forward.3} parent=11 // pred_check
        %p345 = pneg %p259
      $region46: #{residual_block_forward.3} parent=11 // pred_check_branch
        %347 = sbr.rel (%p345) target = $region48
      $region47: #{residual_block_forward.3} parent=11 // pred_region
        _
      $region48: #{residual_block_forward.3} parent=11 // pred_fallthru
        _
      // Predicated region
      $region49: #{residual_block_forward.3} parent=11 // pred_check
        %p348 = pneg %p280
      $region50: #{residual_block_forward.3} parent=11 // pred_check_branch
        %350 = sbr.rel (%p348) target = $region52
      $region51: #{residual_block_forward.3} parent=11 // pred_region
        _
      $region52: #{residual_block_forward.3} parent=11 // pred_fallthru
        _
    $region12: #{residual_block_forward.3} parent=5 // pred_fallthru
      _
    %p351 = scmp.lt.s32.totalorder %s18, 2
    // Predicated region
    $region53: #{residual_block_forward.3} parent=5 // pred_check
      %p352 = pneg %p351
    $region54: #{residual_block_forward.3} parent=5 // pred_check_branch
      %354 = sbr.rel (%p352) target = $region56
    $region55: #{residual_block_forward.3} parent=5 // pred_region
      // Predicated region
      $region57: #{residual_block_forward.3} parent=55 // pred_check
        %p355 = pneg %p38
      $region58: #{residual_block_forward.3} parent=55 // pred_check_branch
        %357 = sbr.rel (%p355) target = $region60
      $region59: #{residual_block_forward.3} parent=55 // pred_region
        %p358 = scmp.lt.s32.totalorder %s18, 1
        %s359 = scalar_select %p358, %s18, 1
        %s360 = smul.addr %s359, 14
        %s361 = smul.addr %s360, 8
        %s362 = scalar_lea.vmem %s0, %s361
      $region60: #{residual_block_forward.3} parent=55 // pred_fallthru
        _
      // Predicated region
      $region61: #{residual_block_forward.3} parent=55 // pred_check
        %p363 = pneg %p64
      $region62: #{residual_block_forward.3} parent=55 // pred_check_branch
        %365 = sbr.rel (%p363) target = $region64
      $region63: #{residual_block_forward.3} parent=55 // pred_region
        %p366 = scmp.lt.s32.totalorder %s18, 1
        %s367 = scalar_select %p366, %s18, 1
        %s368 = smul.addr %s367, 18
        %s369 = smul.addr %s368, 8
        %s370 = scalar_lea.vmem %s1, %s369
      $region64: #{residual_block_forward.3} parent=55 // pred_fallthru
        _
    $region56: #{residual_block_forward.3} parent=5 // pred_fallthru
      _
    %p371 = scmp.le.s32.totalorder 1, %s18
    %p372 = scmp.lt.s32.totalorder %s18, 3
    %p373 = pnand %p371, %p372
    %p374 = pneg %p373
    // Predicated region
    $region65: #{residual_block_forward.3} parent=5 // pred_check
      _
    $region66: #{residual_block_forward.3} parent=5 // pred_check_branch
      %376 = sbr.rel (%p373) target = $region68
    $region67: #{residual_block_forward.3} parent=5 // pred_region
      %s377 = ssub.s32 %s18, 1
      %p378 = scmp.lt.s32.totalorder %s23, 1
      %s379 = scalar_select %p378, %s23, 1
      %s380 = smul.addr %s379, 14
      %s381 = smul.addr %s380, 8
      %s382 = scalar_lea.vmem %s0, %s381
      %p383 = pneg %p44
      %p384 = pneg %p41
      %p385 = scmp.lt.s32.totalorder %s23, 1
      %s386 = scalar_select %p385, %s23, 1
      %s387 = smul.addr %s386, 18
      %s388 = smul.addr %s387, 8
      %s389 = scalar_lea.vmem %s1, %s388
      %p390 = pneg %p70
      %p391 = pneg %p67
      %p392 = pneg %p91
      %p393 = pneg %p88
      %p394 = pneg %p112
      %p395 = pneg %p109
      %p396 = pneg %p133
      %p397 = pneg %p130
      %p398 = pneg %p154
      %p399 = pneg %p151
      %p400 = pneg %p175
      %p401 = pneg %p172
      %p402 = pneg %p196
      %p403 = pneg %p193
      %p404 = pneg %p217
      %p405 = pneg %p214
      %p406 = pneg %p238
      %p407 = pneg %p235
      %p408 = pneg %p259
      %p409 = pneg %p256
      %p410 = pneg %p280
      %p411 = pneg %p277
      %p412 = pneg %p306
      %p413 = pneg %p303
      %p414 = scmp.lt.s32.totalorder %s23, 1
      %s415 = scalar_select %p414, %s23, 1
      %s416 = smul.addr %s415, 10
      %s417 = smul.addr %s416, 8
      %s418 = scalar_lea.vmem %s12, %s417
      %p419 = scmp.lt.s32.totalorder %s23, 1
      %s420 = scalar_select %p419, %s23, 1
      %s421 = smul.addr %s420, 14
      %s422 = smul.addr %s421, 8
      %s423 = scalar_lea.vmem %s0, %s422
      %p424 = scmp.lt.s32.totalorder %s23, 1
      %s425 = scalar_select %p424, %s23, 1
      %s426 = smul.addr %s425, 18
      %s427 = smul.addr %s426, 8
      %s428 = scalar_lea.vmem %s1, %s427
      %p429 = scmp.lt.s32.totalorder %s23, 1
      %s430 = scalar_select %p429, %s23, 1
      %s431 = smul.addr %s430, 10
      %s432 = smul.addr %s431, 8
      %s433 = scalar_lea.vmem %s12, %s432
      %v435 = vld [vmem:[%s423] sm:$0xff]
      %v436 = vld [vmem:[%s423 + $0x8] sm:$0xff]
      %v437 = vld [vmem:[%s423 + $0x10] sm:$0xff]
      %v438 = vld [vmem:[%s423 + $0x18] sm:$0xff]
      %v439 = vld [vmem:[%s423 + $0x20] sm:$0xff]
      %v440 = vld [vmem:[%s423 + $0x28] sm:$0xff]
      %v441 = vld [vmem:[%s423 + $0x30] sm:$0xff]
      %v442 = vld [vmem:[%s423 + $0x38] sm:$0xff]
      %v443 = vld [vmem:[%s423 + $0x40] sm:$0xff]
      %v444 = vld [vmem:[%s423 + $0x48] sm:$0xff]
      %v445 = vld [vmem:[%s423 + $0x1] sm:$0xff]
      %v446 = vld [vmem:[%s423 + $0x9] sm:$0xff]
      %v447 = vld [vmem:[%s423 + $0x11] sm:$0xff]
      %v448 = vld [vmem:[%s423 + $0x19] sm:$0xff]
      %v449 = vld [vmem:[%s423 + $0x21] sm:$0xff]
      %v450 = vld [vmem:[%s423 + $0x29] sm:$0xff]
      %v451 = vld [vmem:[%s423 + $0x31] sm:$0xff]
      %v452 = vld [vmem:[%s423 + $0x39] sm:$0xff]
      %v453 = vld [vmem:[%s423 + $0x41] sm:$0xff]
      %v454 = vld [vmem:[%s423 + $0x49] sm:$0xff]
      %v455 = vld [vmem:[%s423 + $0x2] sm:$0xff]
      %v456 = vld [vmem:[%s423 + $0xa] sm:$0xff]
      %v457 = vld [vmem:[%s423 + $0x12] sm:$0xff]
      %v458 = vld [vmem:[%s423 + $0x1a] sm:$0xff]
      %v459 = vld [vmem:[%s423 + $0x22] sm:$0xff]
      %v460 = vld [vmem:[%s423 + $0x2a] sm:$0xff]
      %v461 = vld [vmem:[%s423 + $0x32] sm:$0xff]
      %v462 = vld [vmem:[%s423 + $0x3a] sm:$0xff]
      %v463 = vld [vmem:[%s423 + $0x42] sm:$0xff]
      %v464 = vld [vmem:[%s423 + $0x4a] sm:$0xff]
      %v465 = vld [vmem:[%s423 + $0x52] sm:$0xff]
      %v466 = vld [vmem:[%s423 + $0xb] sm:$0xff]
      %v467 = vld [vmem:[%s423 + $0x13] sm:$0xff]
      %v468 = vld [vmem:[%s423 + $0x1b] sm:$0xff]
      %v469 = vld [vmem:[%s423 + $0x23] sm:$0xff]
      %v470 = vld [vmem:[%s423 + $0x2b] sm:$0xff]
      %v471 = vld [vmem:[%s423 + $0x33] sm:$0xff]
      %v472 = vld [vmem:[%s423 + $0x3b] sm:$0xff]
      %v473 = vld [vmem:[%s423 + $0x43] sm:$0xff]
      %v474 = vld [vmem:[%s423 + $0x4b] sm:$0xff]
      %v475 = vld [vmem:[%s423 + $0x53] sm:$0xff]
      %v476 = vld [vmem:[%s423 + $0xc] sm:$0xff]
      %v477 = vld [vmem:[%s423 + $0x14] sm:$0xff]
      %v478 = vld [vmem:[%s423 + $0x1c] sm:$0xff]
      %v479 = vld [vmem:[%s423 + $0x24] sm:$0xff]
      %v480 = vld [vmem:[%s423 + $0x2c] sm:$0xff]
      %v481 = vld [vmem:[%s423 + $0x34] sm:$0xff]
      %v482 = vld [vmem:[%s423 + $0x3c] sm:$0xff]
      %v483 = vld [vmem:[%s423 + $0x44] sm:$0xff]
      %v484 = vld [vmem:[%s423 + $0x4c] sm:$0xff]
      %v485 = vld [vmem:[%s423 + $0x54] sm:$0xff]
      %v486 = vld [vmem:[%s423 + $0x5c] sm:$0xff]
      %v487 = vld [vmem:[%s423 + $0x15] sm:$0xff]
      %v488 = vld [vmem:[%s423 + $0x1d] sm:$0xff]
      %v489 = vld [vmem:[%s423 + $0x25] sm:$0xff]
      %v490 = vld [vmem:[%s423 + $0x2d] sm:$0xff]
      %v491 = vld [vmem:[%s423 + $0x35] sm:$0xff]
      %v492 = vld [vmem:[%s423 + $0x3d] sm:$0xff]
      %v493 = vld [vmem:[%s423 + $0x45] sm:$0xff]
      %v494 = vld [vmem:[%s423 + $0x4d] sm:$0xff]
      %v495 = vld [vmem:[%s423 + $0x55] sm:$0xff]
      %v496 = vld [vmem:[%s423 + $0x5d] sm:$0xff]
      %v497 = vld [vmem:[%s423 + $0x16] sm:$0xff]
      %v498 = vld [vmem:[%s423 + $0x1e] sm:$0xff]
      %v499 = vld [vmem:[%s423 + $0x26] sm:$0xff]
      %v500 = vld [vmem:[%s423 + $0x2e] sm:$0xff]
      %v501 = vld [vmem:[%s423 + $0x36] sm:$0xff]
      %v502 = vld [vmem:[%s423 + $0x3e] sm:$0xff]
      %v503 = vld [vmem:[%s423 + $0x46] sm:$0xff]
      %v504 = vld [vmem:[%s423 + $0x4e] sm:$0xff]
      %v505 = vld [vmem:[%s423 + $0x56] sm:$0xff]
      %v506 = vld [vmem:[%s423 + $0x5e] sm:$0xff]
      %517 = vrot.lane.b32.xlu0 %v445, 32
      %v518 = vpop.permute.xlu0 %517
      %519 = vrot.lane.b32.xlu0 %v446, 32
      %v520 = vpop.permute.xlu0 %519
      %521 = vrot.lane.b32.xlu0 %v447, 32
      %v522 = vpop.permute.xlu0 %521
      %523 = vrot.lane.b32.xlu0 %v448, 32
      %v524 = vpop.permute.xlu0 %523
      %525 = vrot.lane.b32.xlu0 %v449, 32
      %v526 = vpop.permute.xlu0 %525
      %527 = vrot.lane.b32.xlu0 %v450, 32
      %v528 = vpop.permute.xlu0 %527
      %529 = vrot.lane.b32.xlu0 %v451, 32
      %v530 = vpop.permute.xlu0 %529
      %531 = vrot.lane.b32.xlu0 %v452, 32
      %v532 = vpop.permute.xlu0 %531
      %533 = vrot.lane.b32.xlu0 %v453, 32
      %v534 = vpop.permute.xlu0 %533
      %535 = vrot.lane.b32.xlu0 %v454, 32
      %v536 = vpop.permute.xlu0 %535
      %557 = vrot.lane.b32.xlu0 %v455, 64
      %v558 = vpop.permute.xlu0 %557
      %559 = vrot.lane.b32.xlu0 %v456, 64
      %v560 = vpop.permute.xlu0 %559
      %561 = vrot.lane.b32.xlu0 %v457, 64
      %v562 = vpop.permute.xlu0 %561
      %563 = vrot.lane.b32.xlu0 %v458, 64
      %v564 = vpop.permute.xlu0 %563
      %565 = vrot.lane.b32.xlu0 %v459, 64
      %v566 = vpop.permute.xlu0 %565
      %567 = vrot.lane.b32.xlu0 %v460, 64
      %v568 = vpop.permute.xlu0 %567
      %569 = vrot.lane.b32.xlu0 %v461, 64
      %v570 = vpop.permute.xlu0 %569
      %571 = vrot.lane.b32.xlu0 %v462, 64
      %v572 = vpop.permute.xlu0 %571
      %573 = vrot.lane.b32.xlu0 %v463, 64
      %v574 = vpop.permute.xlu0 %573
      %575 = vrot.lane.b32.xlu0 %v464, 64
      %v576 = vpop.permute.xlu0 %575
      %588 = vrot.lane.b32.xlu0 %v456, 96
      %v589 = vpop.permute.xlu0 %588
      %590 = vrot.lane.b32.xlu0 %v457, 96
      %v591 = vpop.permute.xlu0 %590
      %592 = vrot.lane.b32.xlu0 %v458, 96
      %v593 = vpop.permute.xlu0 %592
      %594 = vrot.lane.b32.xlu0 %v459, 96
      %v595 = vpop.permute.xlu0 %594
      %596 = vrot.lane.b32.xlu0 %v460, 96
      %v597 = vpop.permute.xlu0 %596
      %598 = vrot.lane.b32.xlu0 %v461, 96
      %v599 = vpop.permute.xlu0 %598
      %600 = vrot.lane.b32.xlu0 %v462, 96
      %v601 = vpop.permute.xlu0 %600
      %602 = vrot.lane.b32.xlu0 %v463, 96
      %v603 = vpop.permute.xlu0 %602
      %604 = vrot.lane.b32.xlu0 %v464, 96
      %v605 = vpop.permute.xlu0 %604
      %606 = vrot.lane.b32.xlu0 %v465, 96
      %v607 = vpop.permute.xlu0 %606
      %628 = vrot.lane.b32.xlu0 %v476, 32
      %v629 = vpop.permute.xlu0 %628
      %630 = vrot.lane.b32.xlu0 %v477, 32
      %v631 = vpop.permute.xlu0 %630
      %632 = vrot.lane.b32.xlu0 %v478, 32
      %v633 = vpop.permute.xlu0 %632
      %634 = vrot.lane.b32.xlu0 %v479, 32
      %v635 = vpop.permute.xlu0 %634
      %636 = vrot.lane.b32.xlu0 %v480, 32
      %v637 = vpop.permute.xlu0 %636
      %638 = vrot.lane.b32.xlu0 %v481, 32
      %v639 = vpop.permute.xlu0 %638
      %640 = vrot.lane.b32.xlu0 %v482, 32
      %v641 = vpop.permute.xlu0 %640
      %642 = vrot.lane.b32.xlu0 %v483, 32
      %v643 = vpop.permute.xlu0 %642
      %644 = vrot.lane.b32.xlu0 %v484, 32
      %v645 = vpop.permute.xlu0 %644
      %646 = vrot.lane.b32.xlu0 %v485, 32
      %v647 = vpop.permute.xlu0 %646
      %659 = vrot.lane.b32.xlu0 %v477, 64
      %v660 = vpop.permute.xlu0 %659
      %661 = vrot.lane.b32.xlu0 %v478, 64
      %v662 = vpop.permute.xlu0 %661
      %663 = vrot.lane.b32.xlu0 %v479, 64
      %v664 = vpop.permute.xlu0 %663
      %665 = vrot.lane.b32.xlu0 %v480, 64
      %v666 = vpop.permute.xlu0 %665
      %667 = vrot.lane.b32.xlu0 %v481, 64
      %v668 = vpop.permute.xlu0 %667
      %669 = vrot.lane.b32.xlu0 %v482, 64
      %v670 = vpop.permute.xlu0 %669
      %671 = vrot.lane.b32.xlu0 %v483, 64
      %v672 = vpop.permute.xlu0 %671
      %673 = vrot.lane.b32.xlu0 %v484, 64
      %v674 = vpop.permute.xlu0 %673
      %675 = vrot.lane.b32.xlu0 %v485, 64
      %v676 = vpop.permute.xlu0 %675
      %677 = vrot.lane.b32.xlu0 %v486, 64
      %v678 = vpop.permute.xlu0 %677
      %699 = vrot.lane.b32.xlu0 %v487, 96
      %v700 = vpop.permute.xlu0 %699
      %701 = vrot.lane.b32.xlu0 %v488, 96
      %v702 = vpop.permute.xlu0 %701
      %703 = vrot.lane.b32.xlu0 %v489, 96
      %v704 = vpop.permute.xlu0 %703
      %705 = vrot.lane.b32.xlu0 %v490, 96
      %v706 = vpop.permute.xlu0 %705
      %707 = vrot.lane.b32.xlu0 %v491, 96
      %v708 = vpop.permute.xlu0 %707
      %709 = vrot.lane.b32.xlu0 %v492, 96
      %v710 = vpop.permute.xlu0 %709
      %711 = vrot.lane.b32.xlu0 %v493, 96
      %v712 = vpop.permute.xlu0 %711
      %713 = vrot.lane.b32.xlu0 %v494, 96
      %v714 = vpop.permute.xlu0 %713
      %715 = vrot.lane.b32.xlu0 %v495, 96
      %v716 = vpop.permute.xlu0 %715
      %717 = vrot.lane.b32.xlu0 %v496, 96
      %v718 = vpop.permute.xlu0 %717
      %vm729 = vcmask 261120
      %v730 = vsel %vm729, %v435, %v518
      %v731 = vsel %vm729, %v436, %v520
      %v732 = vsel %vm729, %v437, %v522
      %v733 = vsel %vm729, %v438, %v524
      %v734 = vsel %vm729, %v439, %v526
      %v735 = vsel %vm729, %v440, %v528
      %v736 = vsel %vm729, %v441, %v530
      %v737 = vsel %vm729, %v442, %v532
      %v738 = vsel %vm729, %v443, %v534
      %v739 = vsel %vm729, %v444, %v536
      %vm740 = vcmask 523264
      %v741 = vsel %vm740, %v730, %v558
      %v742 = vsel %vm740, %v731, %v560
      %v743 = vsel %vm740, %v732, %v562
      %v744 = vsel %vm740, %v733, %v564
      %v745 = vsel %vm740, %v734, %v566
      %v746 = vsel %vm740, %v735, %v568
      %v747 = vsel %vm740, %v736, %v570
      %v748 = vsel %vm740, %v737, %v572
      %v749 = vsel %vm740, %v738, %v574
      %v750 = vsel %vm740, %v739, %v576
      %vm751 = vcmask 785408
      %v752 = vsel %vm751, %v741, %v589
      %v753 = vsel %vm751, %v742, %v591
      %v754 = vsel %vm751, %v743, %v593
      %v755 = vsel %vm751, %v744, %v595
      %v756 = vsel %vm751, %v745, %v597
      %v757 = vsel %vm751, %v746, %v599
      %v758 = vsel %vm751, %v747, %v601
      %v759 = vsel %vm751, %v748, %v603
      %v760 = vsel %vm751, %v749, %v605
      %v761 = vsel %vm751, %v750, %v607
      %v762 = vsel %vm729, %v466, %v629
      %v763 = vsel %vm729, %v467, %v631
      %v764 = vsel %vm729, %v468, %v633
      %v765 = vsel %vm729, %v469, %v635
      %v766 = vsel %vm729, %v470, %v637
      %v767 = vsel %vm729, %v471, %v639
      %v768 = vsel %vm729, %v472, %v641
      %v769 = vsel %vm729, %v473, %v643
      %v770 = vsel %vm729, %v474, %v645
      %v771 = vsel %vm729, %v475, %v647
      %v772 = vsel %vm740, %v762, %v660
      %v773 = vsel %vm740, %v763, %v662
      %v774 = vsel %vm740, %v764, %v664
      %v775 = vsel %vm740, %v765, %v666
      %v776 = vsel %vm740, %v766, %v668
      %v777 = vsel %vm740, %v767, %v670
      %v778 = vsel %vm740, %v768, %v672
      %v779 = vsel %vm740, %v769, %v674
      %v780 = vsel %vm740, %v770, %v676
      %v781 = vsel %vm740, %v771, %v678
      %v782 = vsel %vm751, %v772, %v700
      %v783 = vsel %vm751, %v773, %v702
      %v784 = vsel %vm751, %v774, %v704
      %v785 = vsel %vm751, %v775, %v706
      %v786 = vsel %vm751, %v776, %v708
      %v787 = vsel %vm751, %v777, %v710
      %v788 = vsel %vm751, %v778, %v712
      %v789 = vsel %vm751, %v779, %v714
      %v790 = vsel %vm751, %v780, %v716
      %v791 = vsel %vm751, %v781, %v718
      %v792 = vpack.c.bf16 %v753, %v752
      %v793 = vpack.c.bf16 %v783, %v782
      %v794 = vpack.c.bf16 %v498, %v497
      %v795 = vpack.c.bf16 %v755, %v754
      %v796 = vpack.c.bf16 %v785, %v784
      %v797 = vpack.c.bf16 %v500, %v499
      %v798 = vpack.c.bf16 %v757, %v756
      %v799 = vpack.c.bf16 %v787, %v786
      %v800 = vpack.c.bf16 %v502, %v501
      %v801 = vpack.c.bf16 %v759, %v758
      %v802 = vpack.c.bf16 %v789, %v788
      %v803 = vpack.c.bf16 %v504, %v503
      %v804 = vpack.c.bf16 %v761, %v760
      %v805 = vpack.c.bf16 %v791, %v790
      %v806 = vpack.c.bf16 %v506, %v505
      %v807 = vld [vmem:[%s3] sm:$0xf]
      %v808 = vld [vmem:[%s3 + $0x4] sm:$0xf]
      %v809 = vld [vmem:[%s3 + $0x8] sm:$0xf]
      %v810 = vld [vmem:[%s3 + $0xc] sm:$0xf]
      %v811 = vld [vmem:[%s3 + $0x10] sm:$0xf]
      %v812 = vld [vmem:[%s3 + $0x14] sm:$0xf]
      %v813 = vld [vmem:[%s3 + $0x18] sm:$0xf]
      %v814 = vld [vmem:[%s3 + $0x1c] sm:$0xf]
      %v815 = vld [vmem:[%s3 + $0x20] sm:$0xf]
      %v816 = vld [vmem:[%s3 + $0x24] sm:$0xf]
      %v817 = vld [vmem:[%s3 + $0x28] sm:$0xf]
      %v818 = vld [vmem:[%s3 + $0x2c] sm:$0xf]
      %v819 = vld [vmem:[%s3 + $0x30] sm:$0xf]
      %v820 = vld [vmem:[%s3 + $0x34] sm:$0xf]
      %v821 = vld [vmem:[%s3 + $0x38] sm:$0xf]
      %v822 = vld [vmem:[%s3 + $0x3c] sm:$0xf]
      %v823 = vld [vmem:[%s3 + $0x40] sm:$0xf]
      %v824 = vld [vmem:[%s3 + $0x44] sm:$0xf]
      %v825 = vld [vmem:[%s3 + $0x48] sm:$0xf]
      %v826 = vld [vmem:[%s3 + $0x4c] sm:$0xf]
      %v827 = vld [vmem:[%s3 + $0x50] sm:$0xf]
      %v828 = vld [vmem:[%s3 + $0x54] sm:$0xf]
      %v829 = vld [vmem:[%s3 + $0x58] sm:$0xf]
      %v830 = vld [vmem:[%s3 + $0x5c] sm:$0xf]
      %v831 = vld [vmem:[%s3 + $0x60] sm:$0xf]
      %v832 = vld [vmem:[%s3 + $0x64] sm:$0xf]
      %v833 = vld [vmem:[%s3 + $0x68] sm:$0xf]
      %v834 = vld [vmem:[%s3 + $0x6c] sm:$0xf]
      %v835 = vld [vmem:[%s3 + $0x70] sm:$0xf]
      %v836 = vld [vmem:[%s3 + $0x74] sm:$0xf]
      %v837 = vld [vmem:[%s3 + $0x78] sm:$0xf]
      %v838 = vld [vmem:[%s3 + $0x7c] sm:$0xf]
      %v839 = vld [vmem:[%s3 + $0x80] sm:$0xf]
      %v840 = vld [vmem:[%s3 + $0x84] sm:$0xf]
      %v841 = vld [vmem:[%s3 + $0x88] sm:$0xf]
      %v842 = vld [vmem:[%s3 + $0x8c] sm:$0xf]
      %v879 = vunpack.c.l.b16 %v807
      %v880 = vunpack.c.l.b16 %v808
      %v881 = vunpack.c.l.b16 %v809
      %v882 = vunpack.c.l.b16 %v810
      %v883 = vunpack.c.l.b16 %v811
      %v884 = vunpack.c.l.b16 %v812
      %v885 = vunpack.c.l.b16 %v813
      %v886 = vunpack.c.l.b16 %v814
      %v887 = vunpack.c.l.b16 %v815
      %v888 = vunpack.c.l.b16 %v816
      %v889 = vunpack.c.l.b16 %v817
      %v890 = vunpack.c.l.b16 %v818
      %v891 = vunpack.c.l.b16 %v819
      %v892 = vunpack.c.l.b16 %v820
      %v893 = vunpack.c.l.b16 %v821
      %v894 = vunpack.c.l.b16 %v822
      %v895 = vunpack.c.l.b16 %v823
      %v896 = vunpack.c.l.b16 %v824
      %v897 = vunpack.c.l.b16 %v825
      %v898 = vunpack.c.l.b16 %v826
      %v899 = vunpack.c.l.b16 %v827
      %v900 = vunpack.c.l.b16 %v828
      %v901 = vunpack.c.l.b16 %v829
      %v902 = vunpack.c.l.b16 %v830
      %v903 = vunpack.c.l.b16 %v831
      %v904 = vunpack.c.l.b16 %v832
      %v905 = vunpack.c.l.b16 %v833
      %v906 = vunpack.c.l.b16 %v834
      %v907 = vunpack.c.l.b16 %v835
      %v908 = vunpack.c.l.b16 %v836
      %v909 = vunpack.c.l.b16 %v837
      %v910 = vunpack.c.l.b16 %v838
      %v911 = vunpack.c.l.b16 %v839
      %v912 = vunpack.c.l.b16 %v840
      %v913 = vunpack.c.l.b16 %v841
      %v914 = vunpack.c.l.b16 %v842
      %v915 = vpack.c.b16 %v880, %v879
      %v916 = vpack.c.b16 %v882, %v881
      %v917 = vpack.c.b16 %v884, %v883
      %v918 = vpack.c.b16 %v886, %v885
      %v919 = vpack.c.b16 %v888, %v887
      %v920 = vpack.c.b16 %v890, %v889
      %v921 = vpack.c.b16 %v892, %v891
      %v922 = vpack.c.b16 %v894, %v893
      %v923 = vpack.c.b16 %v896, %v895
      %v924 = vpack.c.b16 %v898, %v897
      %v925 = vpack.c.b16 %v900, %v899
      %v926 = vpack.c.b16 %v902, %v901
      %v927 = vpack.c.b16 %v904, %v903
      %v928 = vpack.c.b16 %v906, %v905
      %v929 = vpack.c.b16 %v908, %v907
      %v930 = vpack.c.b16 %v910, %v909
      %v931 = vpack.c.b16 %v912, %v911
      %v932 = vpack.c.b16 %v914, %v913
      %v952 = vsel %vm729, %v794, 0
      %v955 = vsel %vm729, %v797, 0
      %v958 = vsel %vm729, %v800, 0
      %v961 = vsel %vm729, %v803, 0
      %v964 = vsel %vm729, %v806, 0
      %966 = vmatpush.bf16.msra.mxu0 %v922
      %967 = vmatpush.bf16.msra.mxu0 %v921
      %968 = vmatpush.bf16.msra.mxu0 %v920
      %969 = vmatpush.bf16.msra.mxu0 %v919
      %970 = vmatpush.bf16.msra.mxu0 %v918
      %971 = vmatpush.bf16.msra.mxu0 %v917
      %972 = vmatpush.bf16.msra.mxu0 %v916
      %973 = vmatpush.bf16.msra.mxu0 %v915
      %974 = vmatmul.bf16.gmra.mxu0 %v792
      %v975 = vpop.f32.mrf.mxu0
      %v976 = vadd.f32 0.0, %v975
      %v977 = vpop.f32.mrf.mxu0
      %v978 = vadd.f32 0.0, %v977
      %979 = vmatmul.bf16.gmra.mxu0 %v795
      %v980 = vpop.f32.mrf.mxu0
      %v981 = vadd.f32 0.0, %v980
      %v982 = vpop.f32.mrf.mxu0
      %v983 = vadd.f32 0.0, %v982
      %984 = vmatmul.bf16.gmra.mxu0 %v798
      %v985 = vpop.f32.mrf.mxu0
      %v986 = vadd.f32 0.0, %v985
      %v987 = vpop.f32.mrf.mxu0
      %v988 = vadd.f32 0.0, %v987
      %989 = vmatmul.bf16.gmra.mxu0 %v801
      %v990 = vpop.f32.mrf.mxu0
      %v991 = vadd.f32 0.0, %v990
      %v992 = vpop.f32.mrf.mxu0
      %v993 = vadd.f32 0.0, %v992
      %994 = vmatmul.bf16.gmra.mxu0 %v804
      %v995 = vpop.f32.mrf.mxu0
      %v996 = vadd.f32 0.0, %v995
      %v997 = vpop.f32.mrf.mxu0
      %v998 = vadd.f32 0.0, %v997
      %999 = vdwg.mxu0
      %1000 = vmatpush.bf16.msra.mxu0 %v930
      %1001 = vmatpush.bf16.msra.mxu0 %v929
      %1002 = vmatpush.bf16.msra.mxu0 %v928
      %1003 = vmatpush.bf16.msra.mxu0 %v927
      %1004 = vmatpush.bf16.msra.mxu0 %v926
      %1005 = vmatpush.bf16.msra.mxu0 %v925
      %1006 = vmatpush.bf16.msra.mxu0 %v924
      %1007 = vmatpush.bf16.msra.mxu0 %v923
      %1008 = vmatmul.bf16.gmra.mxu0 %v793
      %v1009 = vpop.f32.mrf.mxu0
      %v1010 = vadd.f32 %v976, %v1009
      %v1011 = vpop.f32.mrf.mxu0
      %v1012 = vadd.f32 %v978, %v1011
      %1013 = vmatmul.bf16.gmra.mxu0 %v796
      %v1014 = vpop.f32.mrf.mxu0
      %v1015 = vadd.f32 %v981, %v1014
      %v1016 = vpop.f32.mrf.mxu0
      %v1017 = vadd.f32 %v983, %v1016
      %1018 = vmatmul.bf16.gmra.mxu0 %v799
      %v1019 = vpop.f32.mrf.mxu0
      %v1020 = vadd.f32 %v986, %v1019
      %v1021 = vpop.f32.mrf.mxu0
      %v1022 = vadd.f32 %v988, %v1021
      %1023 = vmatmul.bf16.gmra.mxu0 %v802
      %v1024 = vpop.f32.mrf.mxu0
      %v1025 = vadd.f32 %v991, %v1024
      %v1026 = vpop.f32.mrf.mxu0
      %v1027 = vadd.f32 %v993, %v1026
      %1028 = vmatmul.bf16.gmra.mxu0 %v805
      %v1029 = vpop.f32.mrf.mxu0
      %v1030 = vadd.f32 %v996, %v1029
      %v1031 = vpop.f32.mrf.mxu0
      %v1032 = vadd.f32 %v998, %v1031
      %1033 = vdwg.mxu0
      %1034 = vmatpush.bf16.msra.mxu0 0
      %1035 = vmatpush.bf16.msra.mxu0 0
      %1036 = vmatpush.bf16.msra.mxu0 0
      %1037 = vmatpush.bf16.msra.mxu0 0
      %1038 = vmatpush.bf16.msra.mxu0 0
      %1039 = vmatpush.bf16.msra.mxu0 0
      %1040 = vmatpush.bf16.msra.mxu0 %v932
      %1041 = vmatpush.bf16.msra.mxu0 %v931
      %1042 = vmatmul.bf16.gmra.mxu0 %v952
      %v1043 = vpop.f32.mrf.mxu0
      %v1044 = vadd.f32 %v1010, %v1043
      %v1045 = vpop.f32.mrf.mxu0
      %v1046 = vadd.f32 %v1012, %v1045
      %1047 = vmatmul.bf16.gmra.mxu0 %v955
      %v1048 = vpop.f32.mrf.mxu0
      %v1049 = vadd.f32 %v1015, %v1048
      %v1050 = vpop.f32.mrf.mxu0
      %v1051 = vadd.f32 %v1017, %v1050
      %1052 = vmatmul.bf16.gmra.mxu0 %v958
      %v1053 = vpop.f32.mrf.mxu0
      %v1054 = vadd.f32 %v1020, %v1053
      %v1055 = vpop.f32.mrf.mxu0
      %v1056 = vadd.f32 %v1022, %v1055
      %1057 = vmatmul.bf16.gmra.mxu0 %v961
      %v1058 = vpop.f32.mrf.mxu0
      %v1059 = vadd.f32 %v1025, %v1058
      %v1060 = vpop.f32.mrf.mxu0
      %v1061 = vadd.f32 %v1027, %v1060
      %1062 = vmatmul.bf16.gmra.mxu0 %v964
      %v1063 = vpop.f32.mrf.mxu0
      %v1064 = vadd.f32 %v1030, %v1063
      %v1065 = vpop.f32.mrf.mxu0
      %v1066 = vadd.f32 %v1032, %v1065
      %1067 = vdwg.mxu0
      %v1068 = vld [vmem:[%s4] sm:$0x1]
      %v1070 = vperm.slane %v1068, 0
      %v1072 = vmul.f32 %v1044, %v1070
      %v1073 = vmul.f32 %v1046, %v1070
      %v1074 = vmul.f32 %v1049, %v1070
      %v1075 = vmul.f32 %v1051, %v1070
      %v1076 = vmul.f32 %v1054, %v1070
      %v1077 = vmul.f32 %v1056, %v1070
      %v1078 = vmul.f32 %v1059, %v1070
      %v1079 = vmul.f32 %v1061, %v1070
      %v1080 = vmul.f32 %v1064, %v1070
      %v1081 = vmul.f32 %v1066, %v1070
      %v1082 = vld [vmem:[%s5] sm:$0x1]
      %v1084 = vperm.slane %v1082, 0
      %v1086 = vadd.f32 %v1072, %v1084
      %v1087 = vadd.f32 %v1073, %v1084
      %v1088 = vadd.f32 %v1074, %v1084
      %v1089 = vadd.f32 %v1075, %v1084
      %v1090 = vadd.f32 %v1076, %v1084
      %v1091 = vadd.f32 %v1077, %v1084
      %v1092 = vadd.f32 %v1078, %v1084
      %v1093 = vadd.f32 %v1079, %v1084
      %v1094 = vadd.f32 %v1080, %v1084
      %v1095 = vadd.f32 %v1081, %v1084
      %v1096 = vld [vmem:[%s2] sm:$0xff]
      %v1097 = vld [vmem:[%s2 + $0x8] sm:$0xff]
      %v1098 = vld [vmem:[%s2 + $0x10] sm:$0xff]
      %v1099 = vld [vmem:[%s2 + $0x18] sm:$0xff]
      %v1100 = vld [vmem:[%s2 + $0x20] sm:$0xff]
      %v1101 = vld [vmem:[%s2 + $0x28] sm:$0xff]
      %v1102 = vld [vmem:[%s2 + $0x30] sm:$0xff]
      %v1103 = vld [vmem:[%s2 + $0x38] sm:$0xff]
      %v1104 = vld [vmem:[%s2 + $0x40] sm:$0xff]
      %v1105 = vld [vmem:[%s2 + $0x48] sm:$0xff]
      %1107 = vset.pattern.permute.xlu0 0
      %1108 = vperm.xlu0 %1107, %v1096
      %v1109 = vpop.permute.xlu0 %1108
      %1112 = vset.pattern.permute.xlu0 0
      %1113 = vperm.xlu0 %1112, %v1097
      %v1114 = vpop.permute.xlu0 %1113
      %1117 = vset.pattern.permute.xlu0 0
      %1118 = vperm.xlu0 %1117, %v1098
      %v1119 = vpop.permute.xlu0 %1118
      %1122 = vset.pattern.permute.xlu0 0
      %1123 = vperm.xlu0 %1122, %v1099
      %v1124 = vpop.permute.xlu0 %1123
      %1127 = vset.pattern.permute.xlu0 0
      %1128 = vperm.xlu0 %1127, %v1100
      %v1129 = vpop.permute.xlu0 %1128
      %1132 = vset.pattern.permute.xlu0 0
      %1133 = vperm.xlu0 %1132, %v1101
      %v1134 = vpop.permute.xlu0 %1133
      %1137 = vset.pattern.permute.xlu0 0
      %1138 = vperm.xlu0 %1137, %v1102
      %v1139 = vpop.permute.xlu0 %1138
      %1142 = vset.pattern.permute.xlu0 0
      %1143 = vperm.xlu0 %1142, %v1103
      %v1144 = vpop.permute.xlu0 %1143
      %1147 = vset.pattern.permute.xlu0 0
      %1148 = vperm.xlu0 %1147, %v1104
      %v1149 = vpop.permute.xlu0 %1148
      %1152 = vset.pattern.permute.xlu0 0
      %1153 = vperm.xlu0 %1152, %v1105
      %v1154 = vpop.permute.xlu0 %1153
      %v1156 = vmul.f32 %v1086, %v1109
      %v1157 = vmul.f32 %v1087, %v1114
      %v1158 = vmul.f32 %v1088, %v1119
      %v1159 = vmul.f32 %v1089, %v1124
      %v1160 = vmul.f32 %v1090, %v1129
      %v1161 = vmul.f32 %v1091, %v1134
      %v1162 = vmul.f32 %v1092, %v1139
      %v1163 = vmul.f32 %v1093, %v1144
      %v1164 = vmul.f32 %v1094, %v1149
      %v1165 = vmul.f32 %v1095, %v1154
      %v1166 = vsel %vm729, %v1156, 0.0
      %v1167 = vsel %vm729, %v1157, 0.0
      %v1168 = vadd.f32 %v1166, %v1167
      %v1169 = vsel %vm729, %v1158, 0.0
      %v1170 = vadd.f32 %v1168, %v1169
      %v1171 = vsel %vm729, %v1159, 0.0
      %v1172 = vadd.f32 %v1170, %v1171
      %v1173 = vsel %vm729, %v1160, 0.0
      %v1174 = vadd.f32 %v1172, %v1173
      %v1175 = vsel %vm729, %v1161, 0.0
      %v1176 = vadd.f32 %v1174, %v1175
      %v1177 = vsel %vm729, %v1162, 0.0
      %v1178 = vadd.f32 %v1176, %v1177
      %v1179 = vsel %vm729, %v1163, 0.0
      %v1180 = vadd.f32 %v1178, %v1179
      %v1181 = vsel %vm729, %v1164, 0.0
      %v1182 = vadd.f32 %v1180, %v1181
      %v1183 = vsel %vm729, %v1165, 0.0
      %v1184 = vadd.f32 %v1182, %v1183
      %v1185 = vrot.slane %v1184, 4
      %v1186 = vadd.f32 %v1184, %v1185
      %v1187 = vrot.slane %v1186, 2
      %v1188 = vadd.f32 %v1186, %v1187
      %v1189 = vrot.slane %v1188, 1
      %v1190 = vadd.f32 %v1188, %v1189
      %v1191 = vmul.f32 %v1190, 0.015625
      %v1192 = vld [vmem:[%s8] sm:$0xff]
      %v1193 = vld [vmem:[%s8 + $0x8] sm:$0xff]
      %v1194 = vld [vmem:[%s8 + $0x10] sm:$0xff]
      %v1195 = vld [vmem:[%s8 + $0x18] sm:$0xff]
      %v1196 = vld [vmem:[%s9] sm:$0x1]
      %v1198 = vsel %vm729, %v1191, 0
      %1200 = vmatpush.msra.mxu0 0.0
      %1201 = vmatpush.msra.mxu0 0.0
      %1202 = vmatpush.msra.mxu0 0.0
      %1203 = vmatpush.msra.mxu0 0.0
      %1204 = vmatpush.msra.mxu0 0.0
      %1205 = vmatpush.msra.mxu0 0.0
      %1206 = vmatpush.msra.mxu0 0.0
      %1207 = vmatpush.msra.mxu0 0.0
      %1208 = vmatpush.msra.mxu0 0.0
      %1209 = vmatpush.msra.mxu0 0.0
      %1210 = vmatpush.msra.mxu0 0.0
      %1211 = vmatpush.msra.mxu0 0.0
      %1212 = vmatpush.msra.mxu0 %v1195
      %1213 = vmatpush.msra.mxu0 %v1194
      %1214 = vmatpush.msra.mxu0 %v1193
      %1215 = vmatpush.msra.mxu0 %v1192
      %1216 = vmatmul.f32.gmra.mxu0 %v1198
      %v1217 = vpop.f32.mrf.mxu0
      %v1218 = vadd.f32 %v1196, %v1217
      %1219 = vdwg.mxu0
      %v1220 = vmax.f32 %v1218, 0.0
      %v1221 = vld [vmem:[%s10] sm:$0x3]
      %v1222 = vld [vmem:[%s11] sm:$0x1]
      %vm1223 = vcmask 15360
      %v1225 = vsel %vm1223, %v1220, 0
      %vm1227 = vcmask 1041408
      %v1229 = vsel %vm1227, %v1221, 0
      %1231 = vmatpush.msra.mxu0 0.0
      %1232 = vmatpush.msra.mxu0 0.0
      %1233 = vmatpush.msra.mxu0 0.0
      %1234 = vmatpush.msra.mxu0 0.0
      %1235 = vmatpush.msra.mxu0 0.0
      %1236 = vmatpush.msra.mxu0 0.0
      %1237 = vmatpush.msra.mxu0 0.0
      %1238 = vmatpush.msra.mxu0 0.0
      %1239 = vmatpush.msra.mxu0 0.0
      %1240 = vmatpush.msra.mxu0 0.0
      %1241 = vmatpush.msra.mxu0 0.0
      %1242 = vmatpush.msra.mxu0 0.0
      %1243 = vmatpush.msra.mxu0 0.0
      %1244 = vmatpush.msra.mxu0 0.0
      %1245 = vmatpush.msra.mxu0 0.0
      %1246 = vmatpush.msra.mxu0 %v1229
      %1247 = vmatmul.f32.gmra.mxu0 %v1225
      %v1248 = vpop.f32.mrf.mxu0
      %v1249 = vadd.f32 %v1222, %v1248
      %1250 = vdwg.mxu0
      %v1251 = vxor.u32 %v1249, 2147483648
      %v1252 = vmul.f32 %v1251, 1.442695
      %v1253 = vpow.pop %v1252
      %v1254 = vadd.f32 %v1253, 1.0
      %v1255 = vrcp.pop %v1254
      %v1256 = vmul.f32 %v1254, %v1255
      %v1257 = vsub.f32 1.0, %v1256
      %v1258 = vmul.f32 %v1255, %v1257
      %v1259 = vadd.f32 %v1255, %v1258
      %vm1260 = vweird.f32 %v1254
      %vm1261 = vweird.f32 %v1255
      %vm1262 = vmor %vm1260, %vm1261
      %v1263 = vsel %vm1262, %v1255, %v1259
      %v1264 = vand.u32 2147483647, %v1254
      %vm1265 = vcmp.eq.f32.partialorder %v1264, 8.507059e+37
      %v1266 = vand.u32 %v1254, 2147483648
      %v1267 = vor.u32 1.1754944e-38, %v1266
      %v1268 = vsel %vm1265, %v1267, %v1263
      %v1269 = vmul.f32 1.0, %v1268
      %v1270 = vld [vmem:[%s428 + $0x16] sm:$0xff]
      %v1271 = vld [vmem:[%s428 + $0x1e] sm:$0xff]
      %v1272 = vld [vmem:[%s428 + $0x26] sm:$0xff]
      %v1273 = vld [vmem:[%s428 + $0x2e] sm:$0xff]
      %v1274 = vld [vmem:[%s428 + $0x36] sm:$0xff]
      %v1275 = vld [vmem:[%s428 + $0x3e] sm:$0xff]
      %v1276 = vld [vmem:[%s428 + $0x46] sm:$0xff]
      %v1277 = vld [vmem:[%s428 + $0x4e] sm:$0xff]
      %v1278 = vld [vmem:[%s428 + $0x56] sm:$0xff]
      %v1279 = vld [vmem:[%s428 + $0x5e] sm:$0xff]
      %v1280 = vpack.c.bf16 %v1271, %v1270
      %v1281 = vpack.c.bf16 %v1273, %v1272
      %v1282 = vpack.c.bf16 %v1275, %v1274
      %v1283 = vpack.c.bf16 %v1277, %v1276
      %v1284 = vpack.c.bf16 %v1279, %v1278
      %v1285 = vld [vmem:[%s6] sm:$0xf]
      %v1286 = vld [vmem:[%s6 + $0x4] sm:$0xf]
      %v1287 = vld [vmem:[%s7] sm:$0x1]
      %v1289 = vperm.slane %v1287, 0
      %v1293 = vunpack.c.l.b16 %v1285
      %v1294 = vunpack.c.l.b16 %v1286
      %v1295 = vpack.c.b16 %v1294, %v1293
      %vm1297 = vcmask 130048
      %v1299 = vsel %vm1297, %v1280, 0
      %v1302 = vsel %vm1297, %v1281, 0
      %v1305 = vsel %vm1297, %v1282, 0
      %v1308 = vsel %vm1297, %v1283, 0
      %v1311 = vsel %vm1297, %v1284, 0
      %1313 = vmatpush.bf16.msra.mxu0 0
      %1314 = vmatpush.bf16.msra.mxu0 0
      %1315 = vmatpush.bf16.msra.mxu0 0
      %1316 = vmatpush.bf16.msra.mxu0 0
      %1317 = vmatpush.bf16.msra.mxu0 0
      %1318 = vmatpush.bf16.msra.mxu0 0
      %1319 = vmatpush.bf16.msra.mxu0 0
      %1320 = vmatpush.bf16.msra.mxu0 %v1295
      %1321 = vmatmul.bf16.gmra.mxu0 %v1299
      %v1322 = vpop.f32.mrf.mxu0
      %v1323 = vadd.f32 %v1289, %v1322
      %v1324 = vpop.f32.mrf.mxu0
      %v1325 = vadd.f32 %v1289, %v1324
      %1326 = vmatmul.bf16.gmra.mxu0 %v1302
      %v1327 = vpop.f32.mrf.mxu0
      %v1328 = vadd.f32 %v1289, %v1327
      %v1329 = vpop.f32.mrf.mxu0
      %v1330 = vadd.f32 %v1289, %v1329
      %1331 = vmatmul.bf16.gmra.mxu0 %v1305
      %v1332 = vpop.f32.mrf.mxu0
      %v1333 = vadd.f32 %v1289, %v1332
      %v1334 = vpop.f32.mrf.mxu0
      %v1335 = vadd.f32 %v1289, %v1334
      %1336 = vmatmul.bf16.gmra.mxu0 %v1308
      %v1337 = vpop.f32.mrf.mxu0
      %v1338 = vadd.f32 %v1289, %v1337
      %v1339 = vpop.f32.mrf.mxu0
      %v1340 = vadd.f32 %v1289, %v1339
      %1341 = vmatmul.bf16.gmra.mxu0 %v1311
      %v1342 = vpop.f32.mrf.mxu0
      %v1343 = vadd.f32 %v1289, %v1342
      %v1344 = vpop.f32.mrf.mxu0
      %v1345 = vadd.f32 %v1289, %v1344
      %1346 = vdwg.mxu0
      %v1347 = vperm.slane %v1269, 0
      %v1348 = vmul.f32 %v1086, %v1347
      %v1349 = vmul.f32 %v1087, %v1347
      %v1350 = vmul.f32 %v1088, %v1347
      %v1351 = vmul.f32 %v1089, %v1347
      %v1352 = vmul.f32 %v1090, %v1347
      %v1353 = vmul.f32 %v1091, %v1347
      %v1354 = vmul.f32 %v1092, %v1347
      %v1355 = vmul.f32 %v1093, %v1347
      %v1356 = vmul.f32 %v1094, %v1347
      %v1357 = vmul.f32 %v1095, %v1347
      %v1358 = vadd.f32 %v1348, %v1323
      %v1359 = vadd.f32 %v1349, %v1325
      %v1360 = vadd.f32 %v1350, %v1328
      %v1361 = vadd.f32 %v1351, %v1330
      %v1362 = vadd.f32 %v1352, %v1333
      %v1363 = vadd.f32 %v1353, %v1335
      %v1364 = vadd.f32 %v1354, %v1338
      %v1365 = vadd.f32 %v1355, %v1340
      %v1366 = vadd.f32 %v1356, %v1343
      %v1367 = vadd.f32 %v1357, %v1345
      %v1368 = vmax.f32 %v1358, 0.0
      %v1369 = vmax.f32 %v1359, 0.0
      %v1370 = vmax.f32 %v1360, 0.0
      %v1371 = vmax.f32 %v1361, 0.0
      %v1372 = vmax.f32 %v1362, 0.0
      %v1373 = vmax.f32 %v1363, 0.0
      %v1374 = vmax.f32 %v1364, 0.0
      %v1375 = vmax.f32 %v1365, 0.0
      %v1376 = vmax.f32 %v1366, 0.0
      %v1377 = vmax.f32 %v1367, 0.0
      %1378 = vst.msk [vmem:[%s433] sm:$0xff] %vm729, %v1368
      %1379 = vst.msk [vmem:[%s433 + $0x8] sm:$0xff] %vm729, %v1369
      %1380 = vst.msk [vmem:[%s433 + $0x10] sm:$0xff] %vm729, %v1370
      %1381 = vst.msk [vmem:[%s433 + $0x18] sm:$0xff] %vm729, %v1371
      %1382 = vst.msk [vmem:[%s433 + $0x20] sm:$0xff] %vm729, %v1372
      %1383 = vst.msk [vmem:[%s433 + $0x28] sm:$0xff] %vm729, %v1373
      %1384 = vst.msk [vmem:[%s433 + $0x30] sm:$0xff] %vm729, %v1374
      %1385 = vst.msk [vmem:[%s433 + $0x38] sm:$0xff] %vm729, %v1375
      %1386 = vst.msk [vmem:[%s433 + $0x40] sm:$0xff] %vm729, %v1376
      %1387 = vst.msk [vmem:[%s433 + $0x48] sm:$0xff] %vm729, %v1377
      %p1388 = scmp.lt.s32.totalorder %s23, 1
      %s1389 = scalar_select %p1388, %s23, 1
      %s1390 = smul.addr %s1389, 10
      %s1391 = smul.addr %s1390, 8
      %s1392 = scalar_lea.vmem %s12, %s1391
      // Predicated region
      $region69: #{residual_block_forward.3} parent=67 // pred_check
        %p1393 = pneg %p303
      $region70: #{residual_block_forward.3} parent=67 // pred_check_branch
        %1395 = sbr.rel (%p1393) target = $region72
      $region71: #{residual_block_forward.3} parent=67 // pred_region
        _
      $region72: #{residual_block_forward.3} parent=67 // pred_fallthru
        _
    $region68: #{residual_block_forward.3} parent=5 // pred_fallthru
      _
    %p1396 = scmp.le.s32.totalorder 2, %s18
    // Predicated region
    $region73: #{residual_block_forward.3} parent=5 // pred_check
      %p1397 = pneg %p1396
    $region74: #{residual_block_forward.3} parent=5 // pred_check_branch
      %1399 = sbr.rel (%p1397) target = $region76
    $region75: #{residual_block_forward.3} parent=5 // pred_region
      %s1400 = ssub.s32 %s18, 2
      // Predicated region
      $region77: #{residual_block_forward.3} parent=75 // pred_check
        %p1401 = pneg %p309
      $region78: #{residual_block_forward.3} parent=75 // pred_check_branch
        %1403 = sbr.rel (%p1401) target = $region80
      $region79: #{residual_block_forward.3} parent=75 // pred_region
        %p1404 = scmp.lt.s32.totalorder %s24, 1
        %s1405 = scalar_select %p1404, %s24, 1
        %s1406 = smul.addr %s1405, 10
        %s1407 = smul.addr %s1406, 8
        %s1408 = scalar_lea.vmem %s12, %s1407
      $region80: #{residual_block_forward.3} parent=75 // pred_fallthru
        _
    $region76: #{residual_block_forward.3} parent=5 // pred_fallthru
      _
  $region6: #{residual_block_forward.3} parent=0 // loop_footer
    %s22 = sadd.s32 1, %s18
  $region7: #{residual_block_forward.3} parent=0 // loop_footer_branch
    %17 = sbr.rel target = $region3
  $region8: #{residual_block_forward.3} parent=0 // loop_exit
    _

// kernel: residual_block_forward.2
$region0: #{residual_block_forward.2}
  #allocation0 [shape = 'u32[]', space=smem, size = 0x4, offset = 0x4, fixed_abs, tag = 'smem constant byte address 0x4 - core index']
  #allocation1 [shape = 'u32[72,128]{1,0:T(1,128)}', space=vmem, size = 0x9000, scoped, tag = 'internal scratch']
  %s0 = inlined_call_operand.vmem [shape: f32[2,140,16], index: 0, kind: input, shape index: {}]
  %s1 = inlined_call_operand.vmem [shape: f32[110,1], index: 1, kind: input, shape index: {}]
  %s2 = inlined_call_operand.vmem [shape: bf16[144,32], index: 2, kind: input, shape index: {}]
  %s3 = inlined_call_operand.vmem [shape: f32[1,32], index: 3, kind: input, shape index: {}]
  %s4 = inlined_call_operand.vmem [shape: f32[1,32], index: 4, kind: input, shape index: {}]
  %s5 = inlined_call_operand.vmem [shape: f32[2,110,32], index: 5, kind: output, shape index: {}]
  %s6 = sld [smem:[#allocation0]]
  $region53: #{residual_block_forward.2} parent=0
    _
  %s8 = ssub.s32 1, %s6
  %s9 = scalar_select 0, %s8, %s6
  loop: start=0, step=1, limit=4
  $region2: #{residual_block_forward.2} parent=0 // loop_pre_header
    _
  $region3: #{residual_block_forward.2} parent=0 // loop_header
    %s11 = sphi 0, %s15
    %p12 = scmp.ge.s32.totalorder %s11, 4
    %s21 = sphi 0, %s23
    %s24 = sphi 0, %s21
    %s25 = sphi 0, %s24
    %s41 = sphi 0, %s25
    %s45 = sphi 0, %s45
    %s47 = sphi 0, %s45
    %s48 = sphi 0, %s47
    %s62 = sphi 0, %s48
    %s66 = sphi 0, %s66
    %s68 = sphi 0, %s66
    %s69 = sphi 0, %s68
    %s83 = sphi 0, %s69
    %s87 = sphi 0, %s87
    %s89 = sphi 0, %s87
    %s90 = sphi 0, %s89
    %s104 = sphi 0, %s90
    %s108 = sphi 0, %s108
    %s110 = sphi 0, %s108
    %s111 = sphi 0, %s110
    %s125 = sphi 0, %s111
    %s131 = sphi 0, %s133
    %s134 = sphi 0, %s131
    %s135 = sphi 0, %s134
    %s151 = sphi 0, %s135
  $region4: #{residual_block_forward.2} parent=0 // loop_header_branch
    %14 = sbr.rel (%p12) target = $region8
  $region5: #{residual_block_forward.2} parent=0 // loop_body
    %s16 = ssub.s32 %s11, 1
    %s17 = ssub.s32 %s11, 2
    %s18 = sadd.s32 %s11, 1
    %s19 = ssub.s32 %s11, %s18
    %p20 = scmp.eq.s32.totalorder %s19, 0
    %s22 = sadd.s32 %s21, 1
    %s23 = scalar_select %p20, %s21, %s22
    %p26 = pneg %p20
    %p27 = scmp.eq.s32.totalorder %s11, 1
    %p28 = por %p26, %p27
    %p29 = scmp.ne.s32.totalorder %s21, %s24
    %p30 = scmp.eq.s32.totalorder %s11, 0
    %p31 = por %p29, %p30
    %p32 = scmp.ne.s32.totalorder %s21, %s24
    %p33 = scmp.eq.s32.totalorder %s16, 1
    %p34 = por %p32, %p33
    %p35 = scmp.ne.s32.totalorder %s24, %s25
    %p36 = scmp.eq.s32.totalorder %s16, 0
    %p37 = por %p35, %p36
    %p38 = scmp.ne.s32.totalorder %s24, %s25
    %p39 = scmp.eq.s32.totalorder %s17, 1
    %p40 = por %p38, %p39
    %p42 = scmp.ne.s32.totalorder %s25, %s41
    %p43 = scmp.eq.s32.totalorder %s17, 0
    %p44 = por %p42, %p43
    %s46 = sadd.s32 %s45, 1
    %p49 = scmp.eq.s32.totalorder %s11, 1
    %p50 = scmp.ne.s32.totalorder %s45, %s47
    %p51 = scmp.eq.s32.totalorder %s11, 0
    %p52 = por %p50, %p51
    %p53 = scmp.ne.s32.totalorder %s45, %s47
    %p54 = scmp.eq.s32.totalorder %s16, 1
    %p55 = por %p53, %p54
    %p56 = scmp.ne.s32.totalorder %s47, %s48
    %p57 = scmp.eq.s32.totalorder %s16, 0
    %p58 = por %p56, %p57
    %p59 = scmp.ne.s32.totalorder %s47, %s48
    %p60 = scmp.eq.s32.totalorder %s17, 1
    %p61 = por %p59, %p60
    %p63 = scmp.ne.s32.totalorder %s48, %s62
    %p64 = scmp.eq.s32.totalorder %s17, 0
    %p65 = por %p63, %p64
    %s67 = sadd.s32 %s66, 1
    %p70 = scmp.eq.s32.totalorder %s11, 1
    %p71 = scmp.ne.s32.totalorder %s66, %s68
    %p72 = scmp.eq.s32.totalorder %s11, 0
    %p73 = por %p71, %p72
    %p74 = scmp.ne.s32.totalorder %s66, %s68
    %p75 = scmp.eq.s32.totalorder %s16, 1
    %p76 = por %p74, %p75
    %p77 = scmp.ne.s32.totalorder %s68, %s69
    %p78 = scmp.eq.s32.totalorder %s16, 0
    %p79 = por %p77, %p78
    %p80 = scmp.ne.s32.totalorder %s68, %s69
    %p81 = scmp.eq.s32.totalorder %s17, 1
    %p82 = por %p80, %p81
    %p84 = scmp.ne.s32.totalorder %s69, %s83
    %p85 = scmp.eq.s32.totalorder %s17, 0
    %p86 = por %p84, %p85
    %s88 = sadd.s32 %s87, 1
    %p91 = scmp.eq.s32.totalorder %s11, 1
    %p92 = scmp.ne.s32.totalorder %s87, %s89
    %p93 = scmp.eq.s32.totalorder %s11, 0
    %p94 = por %p92, %p93
    %p95 = scmp.ne.s32.totalorder %s87, %s89
    %p96 = scmp.eq.s32.totalorder %s16, 1
    %p97 = por %p95, %p96
    %p98 = scmp.ne.s32.totalorder %s89, %s90
    %p99 = scmp.eq.s32.totalorder %s16, 0
    %p100 = por %p98, %p99
    %p101 = scmp.ne.s32.totalorder %s89, %s90
    %p102 = scmp.eq.s32.totalorder %s17, 1
    %p103 = por %p101, %p102
    %p105 = scmp.ne.s32.totalorder %s90, %s104
    %p106 = scmp.eq.s32.totalorder %s17, 0
    %p107 = por %p105, %p106
    %s109 = sadd.s32 %s108, 1
    %p112 = scmp.eq.s32.totalorder %s11, 1
    %p113 = scmp.ne.s32.totalorder %s108, %s110
    %p114 = scmp.eq.s32.totalorder %s11, 0
    %p115 = por %p113, %p114
    %p116 = scmp.ne.s32.totalorder %s108, %s110
    %p117 = scmp.eq.s32.totalorder %s16, 1
    %p118 = por %p116, %p117
    %p119 = scmp.ne.s32.totalorder %s110, %s111
    %p120 = scmp.eq.s32.totalorder %s16, 0
    %p121 = por %p119, %p120
    %p122 = scmp.ne.s32.totalorder %s110, %s111
    %p123 = scmp.eq.s32.totalorder %s17, 1
    %p124 = por %p122, %p123
    %p126 = scmp.ne.s32.totalorder %s111, %s125
    %p127 = scmp.eq.s32.totalorder %s17, 0
    %p128 = por %p126, %p127
    %s129 = ssub.s32 %s11, %s18
    %p130 = scmp.eq.s32.totalorder %s129, 0
    %s132 = sadd.s32 %s131, 1
    %s133 = scalar_select %p130, %s131, %s132
    %p136 = pneg %p130
    %p137 = scmp.eq.s32.totalorder %s11, 1
    %p138 = por %p136, %p137
    %p139 = scmp.ne.s32.totalorder %s131, %s134
    %p140 = scmp.eq.s32.totalorder %s11, 0
    %p141 = por %p139, %p140
    %p142 = scmp.ne.s32.totalorder %s131, %s134
    %p143 = scmp.eq.s32.totalorder %s16, 1
    %p144 = por %p142, %p143
    %p145 = scmp.ne.s32.totalorder %s134, %s135
    %p146 = scmp.eq.s32.totalorder %s16, 0
    %p147 = por %p145, %p146
    %p148 = scmp.ne.s32.totalorder %s134, %s135
    %p149 = scmp.eq.s32.totalorder %s17, 1
    %p150 = por %p148, %p149
    %p152 = scmp.ne.s32.totalorder %s135, %s151
    %p153 = scmp.eq.s32.totalorder %s17, 0
    %p154 = por %p152, %p153
    %p155 = scmp.le.s32.totalorder 1, %s11
    %p156 = scmp.lt.s32.totalorder %s11, 3
    %p157 = pnand %p155, %p156
    %p158 = pneg %p157
    // Predicated region
    $region9: #{residual_block_forward.2} parent=5 // pred_check
      _
    $region10: #{residual_block_forward.2} parent=5 // pred_check_branch
      %160 = sbr.rel (%p157) target = $region12
    $region11: #{residual_block_forward.2} parent=5 // pred_region
      %s161 = ssub.s32 %s11, 1
      // Predicated region
      $region13: #{residual_block_forward.2} parent=11 // pred_check
        %p162 = pneg %p58
      $region14: #{residual_block_forward.2} parent=11 // pred_check_branch
        %164 = sbr.rel (%p162) target = $region16
      $region15: #{residual_block_forward.2} parent=11 // pred_region
        _
      $region16: #{residual_block_forward.2} parent=11 // pred_fallthru
        _
      // Predicated region
      $region17: #{residual_block_forward.2} parent=11 // pred_check
        %p165 = pneg %p79
      $region18: #{residual_block_forward.2} parent=11 // pred_check_branch
        %167 = sbr.rel (%p165) target = $region20
      $region19: #{residual_block_forward.2} parent=11 // pred_region
        _
      $region20: #{residual_block_forward.2} parent=11 // pred_fallthru
        _
      // Predicated region
      $region21: #{residual_block_forward.2} parent=11 // pred_check
        %p168 = pneg %p100
      $region22: #{residual_block_forward.2} parent=11 // pred_check_branch
        %170 = sbr.rel (%p168) target = $region24
      $region23: #{residual_block_forward.2} parent=11 // pred_region
        _
      $region24: #{residual_block_forward.2} parent=11 // pred_fallthru
        _
      // Predicated region
      $region25: #{residual_block_forward.2} parent=11 // pred_check
        %p171 = pneg %p121
      $region26: #{residual_block_forward.2} parent=11 // pred_check_branch
        %173 = sbr.rel (%p171) target = $region28
      $region27: #{residual_block_forward.2} parent=11 // pred_region
        _
      $region28: #{residual_block_forward.2} parent=11 // pred_fallthru
        _
    $region12: #{residual_block_forward.2} parent=5 // pred_fallthru
      _
    %p174 = scmp.lt.s32.totalorder %s11, 2
    // Predicated region
    $region29: #{residual_block_forward.2} parent=5 // pred_check
      %p175 = pneg %p174
    $region30: #{residual_block_forward.2} parent=5 // pred_check_branch
      %177 = sbr.rel (%p175) target = $region32
    $region31: #{residual_block_forward.2} parent=5 // pred_region
      // Predicated region
      $region33: #{residual_block_forward.2} parent=31 // pred_check
        %p178 = pneg %p31
      $region34: #{residual_block_forward.2} parent=31 // pred_check_branch
        %180 = sbr.rel (%p178) target = $region36
      $region35: #{residual_block_forward.2} parent=31 // pred_region
        %p181 = scmp.lt.s32.totalorder %s11, 1
        %s182 = scalar_select %p181, %s11, 1
        %s183 = smul.addr %s182, 18
        %s184 = smul.addr %s183, 8
        %s185 = scalar_lea.vmem %s0, %s184
      $region36: #{residual_block_forward.2} parent=31 // pred_fallthru
        _
    $region32: #{residual_block_forward.2} parent=5 // pred_fallthru
      _
    %p186 = scmp.le.s32.totalorder 1, %s11
    %p187 = scmp.lt.s32.totalorder %s11, 3
    %p188 = pnand %p186, %p187
    %p189 = pneg %p188
    // Predicated region
    $region37: #{residual_block_forward.2} parent=5 // pred_check
      _
    $region38: #{residual_block_forward.2} parent=5 // pred_check_branch
      %191 = sbr.rel (%p188) target = $region40
    $region39: #{residual_block_forward.2} parent=5 // pred_region
      %s192 = ssub.s32 %s11, 1
      %p193 = scmp.lt.s32.totalorder %s16, 1
      %s194 = scalar_select %p193, %s16, 1
      %s195 = smul.addr %s194, 18
      %s196 = smul.addr %s195, 8
      %s197 = scalar_lea.vmem %s0, %s196
      %p198 = pneg %p37
      %p199 = pneg %p34
      %p200 = pneg %p58
      %p201 = pneg %p55
      %p202 = pneg %p79
      %p203 = pneg %p76
      %p204 = pneg %p100
      %p205 = pneg %p97
      %p206 = pneg %p121
      %p207 = pneg %p118
      %p208 = pneg %p147
      %p209 = pneg %p144
      %p210 = scmp.lt.s32.totalorder %s16, 1
      %s211 = scalar_select %p210, %s16, 1
      %s212 = smul.addr %s211, 14
      %s213 = smul.addr %s212, 8
      %s214 = scalar_lea.vmem %s5, %s213
      %p215 = scmp.lt.s32.totalorder %s16, 1
      %s216 = scalar_select %p215, %s16, 1
      %s217 = smul.addr %s216, 18
      %s218 = smul.addr %s217, 8
      %s219 = scalar_lea.vmem %s0, %s218
      %p220 = scmp.lt.s32.totalorder %s16, 1
      %s221 = scalar_select %p220, %s16, 1
      %s222 = smul.addr %s221, 14
      %s223 = smul.addr %s222, 8
      %s224 = scalar_lea.vmem %s5, %s223
      %v226 = vld [vmem:[%s219] sm:$0xff]
      %v227 = vld [vmem:[%s219 + $0x8] sm:$0xff]
      %v228 = vld [vmem:[%s219 + $0x10] sm:$0xff]
      %v229 = vld [vmem:[%s219 + $0x18] sm:$0xff]
      %v230 = vld [vmem:[%s219 + $0x20] sm:$0xff]
      %v231 = vld [vmem:[%s219 + $0x28] sm:$0xff]
      %v232 = vld [vmem:[%s219 + $0x30] sm:$0xff]
      %v233 = vld [vmem:[%s219 + $0x38] sm:$0xff]
      %v234 = vld [vmem:[%s219 + $0x40] sm:$0xff]
      %v235 = vld [vmem:[%s219 + $0x48] sm:$0xff]
      %v236 = vld [vmem:[%s219 + $0x50] sm:$0xff]
      %v237 = vld [vmem:[%s219 + $0x58] sm:$0xff]
      %v238 = vld [vmem:[%s219 + $0x60] sm:$0xff]
      %v239 = vld [vmem:[%s219 + $0x68] sm:$0x3f]
      %v240 = vld [vmem:[%s219 + $0x1] sm:$0xff]
      %v241 = vld [vmem:[%s219 + $0x9] sm:$0xff]
      %v242 = vld [vmem:[%s219 + $0x11] sm:$0xff]
      %v243 = vld [vmem:[%s219 + $0x19] sm:$0xff]
      %v244 = vld [vmem:[%s219 + $0x21] sm:$0xff]
      %v245 = vld [vmem:[%s219 + $0x29] sm:$0xff]
      %v246 = vld [vmem:[%s219 + $0x31] sm:$0xff]
      %v247 = vld [vmem:[%s219 + $0x39] sm:$0xff]
      %v248 = vld [vmem:[%s219 + $0x41] sm:$0xff]
      %v249 = vld [vmem:[%s219 + $0x49] sm:$0xff]
      %v250 = vld [vmem:[%s219 + $0x51] sm:$0xff]
      %v251 = vld [vmem:[%s219 + $0x59] sm:$0xff]
      %v252 = vld [vmem:[%s219 + $0x61] sm:$0xff]
      %v253 = vld [vmem:[%s219 + $0x69] sm:$0x3f]
      %v254 = vld [vmem:[%s219 + $0x2] sm:$0xff]
      %v255 = vld [vmem:[%s219 + $0xa] sm:$0xff]
      %v256 = vld [vmem:[%s219 + $0x12] sm:$0xff]
      %v257 = vld [vmem:[%s219 + $0x1a] sm:$0xff]
      %v258 = vld [vmem:[%s219 + $0x22] sm:$0xff]
      %v259 = vld [vmem:[%s219 + $0x2a] sm:$0xff]
      %v260 = vld [vmem:[%s219 + $0x32] sm:$0xff]
      %v261 = vld [vmem:[%s219 + $0x3a] sm:$0xff]
      %v262 = vld [vmem:[%s219 + $0x42] sm:$0xff]
      %v263 = vld [vmem:[%s219 + $0x4a] sm:$0xff]
      %v264 = vld [vmem:[%s219 + $0x52] sm:$0xff]
      %v265 = vld [vmem:[%s219 + $0x5a] sm:$0xff]
      %v266 = vld [vmem:[%s219 + $0x62] sm:$0xff]
      %v267 = vld [vmem:[%s219 + $0x6a] sm:$0x3f]
      %v268 = vld [vmem:[%s219 + $0x6a] sm:$0xff]
      %v269 = vld [vmem:[%s219 + $0x72] sm:$0x3f]
      %v270 = vld [vmem:[%s219 + $0xb] sm:$0xff]
      %v271 = vld [vmem:[%s219 + $0x13] sm:$0xff]
      %v272 = vld [vmem:[%s219 + $0x1b] sm:$0xff]
      %v273 = vld [vmem:[%s219 + $0x23] sm:$0xff]
      %v274 = vld [vmem:[%s219 + $0x2b] sm:$0xff]
      %v275 = vld [vmem:[%s219 + $0x33] sm:$0xff]
      %v276 = vld [vmem:[%s219 + $0x3b] sm:$0xff]
      %v277 = vld [vmem:[%s219 + $0x43] sm:$0xff]
      %v278 = vld [vmem:[%s219 + $0x4b] sm:$0xff]
      %v279 = vld [vmem:[%s219 + $0x53] sm:$0xff]
      %v280 = vld [vmem:[%s219 + $0x5b] sm:$0xff]
      %v281 = vld [vmem:[%s219 + $0x63] sm:$0xff]
      %v282 = vld [vmem:[%s219 + $0x6b] sm:$0xff]
      %v283 = vld [vmem:[%s219 + $0x73] sm:$0x3f]
      %v284 = vld [vmem:[%s219 + $0xc] sm:$0xff]
      %v285 = vld [vmem:[%s219 + $0x14] sm:$0xff]
      %v286 = vld [vmem:[%s219 + $0x1c] sm:$0xff]
      %v287 = vld [vmem:[%s219 + $0x24] sm:$0xff]
      %v288 = vld [vmem:[%s219 + $0x2c] sm:$0xff]
      %v289 = vld [vmem:[%s219 + $0x34] sm:$0xff]
      %v290 = vld [vmem:[%s219 + $0x3c] sm:$0xff]
      %v291 = vld [vmem:[%s219 + $0x44] sm:$0xff]
      %v292 = vld [vmem:[%s219 + $0x4c] sm:$0xff]
      %v293 = vld [vmem:[%s219 + $0x54] sm:$0xff]
      %v294 = vld [vmem:[%s219 + $0x5c] sm:$0xff]
      %v295 = vld [vmem:[%s219 + $0x64] sm:$0xff]
      %v296 = vld [vmem:[%s219 + $0x6c] sm:$0xff]
      %v297 = vld [vmem:[%s219 + $0x74] sm:$0x3f]
      %v298 = vld [vmem:[%s219 + $0x74] sm:$0xff]
      %v299 = vld [vmem:[%s219 + $0x7c] sm:$0x3f]
      %v300 = vld [vmem:[%s219 + $0x15] sm:$0xff]
      %v301 = vld [vmem:[%s219 + $0x1d] sm:$0xff]
      %v302 = vld [vmem:[%s219 + $0x25] sm:$0xff]
      %v303 = vld [vmem:[%s219 + $0x2d] sm:$0xff]
      %v304 = vld [vmem:[%s219 + $0x35] sm:$0xff]
      %v305 = vld [vmem:[%s219 + $0x3d] sm:$0xff]
      %v306 = vld [vmem:[%s219 + $0x45] sm:$0xff]
      %v307 = vld [vmem:[%s219 + $0x4d] sm:$0xff]
      %v308 = vld [vmem:[%s219 + $0x55] sm:$0xff]
      %v309 = vld [vmem:[%s219 + $0x5d] sm:$0xff]
      %v310 = vld [vmem:[%s219 + $0x65] sm:$0xff]
      %v311 = vld [vmem:[%s219 + $0x6d] sm:$0xff]
      %v312 = vld [vmem:[%s219 + $0x75] sm:$0xff]
      %v313 = vld [vmem:[%s219 + $0x7d] sm:$0x3f]
      %v314 = vld [vmem:[%s219 + $0x16] sm:$0xff]
      %v315 = vld [vmem:[%s219 + $0x1e] sm:$0xff]
      %v316 = vld [vmem:[%s219 + $0x26] sm:$0xff]
      %v317 = vld [vmem:[%s219 + $0x2e] sm:$0xff]
      %v318 = vld [vmem:[%s219 + $0x36] sm:$0xff]
      %v319 = vld [vmem:[%s219 + $0x3e] sm:$0xff]
      %v320 = vld [vmem:[%s219 + $0x46] sm:$0xff]
      %v321 = vld [vmem:[%s219 + $0x4e] sm:$0xff]
      %v322 = vld [vmem:[%s219 + $0x56] sm:$0xff]
      %v323 = vld [vmem:[%s219 + $0x5e] sm:$0xff]
      %v324 = vld [vmem:[%s219 + $0x66] sm:$0xff]
      %v325 = vld [vmem:[%s219 + $0x6e] sm:$0xff]
      %v326 = vld [vmem:[%s219 + $0x76] sm:$0xff]
      %v327 = vld [vmem:[%s219 + $0x7e] sm:$0x3f]
      %342 = vrot.lane.b32.xlu0 %v240, 16
      %v343 = vpop.permute.xlu0 %342
      %344 = vrot.lane.b32.xlu0 %v241, 16
      %v345 = vpop.permute.xlu0 %344
      %346 = vrot.lane.b32.xlu0 %v242, 16
      %v347 = vpop.permute.xlu0 %346
      %348 = vrot.lane.b32.xlu0 %v243, 16
      %v349 = vpop.permute.xlu0 %348
      %350 = vrot.lane.b32.xlu0 %v244, 16
      %v351 = vpop.permute.xlu0 %350
      %352 = vrot.lane.b32.xlu0 %v245, 16
      %v353 = vpop.permute.xlu0 %352
      %354 = vrot.lane.b32.xlu0 %v246, 16
      %v355 = vpop.permute.xlu0 %354
      %356 = vrot.lane.b32.xlu0 %v247, 16
      %v357 = vpop.permute.xlu0 %356
      %358 = vrot.lane.b32.xlu0 %v248, 16
      %v359 = vpop.permute.xlu0 %358
      %360 = vrot.lane.b32.xlu0 %v249, 16
      %v361 = vpop.permute.xlu0 %360
      %362 = vrot.lane.b32.xlu0 %v250, 16
      %v363 = vpop.permute.xlu0 %362
      %364 = vrot.lane.b32.xlu0 %v251, 16
      %v365 = vpop.permute.xlu0 %364
      %366 = vrot.lane.b32.xlu0 %v252, 16
      %v367 = vpop.permute.xlu0 %366
      %368 = vrot.lane.b32.xlu0 %v253, 16
      %v369 = vpop.permute.xlu0 %368
      %398 = vrot.lane.b32.xlu0 %v254, 32
      %v399 = vpop.permute.xlu0 %398
      %400 = vrot.lane.b32.xlu0 %v255, 32
      %v401 = vpop.permute.xlu0 %400
      %402 = vrot.lane.b32.xlu0 %v256, 32
      %v403 = vpop.permute.xlu0 %402
      %404 = vrot.lane.b32.xlu0 %v257, 32
      %v405 = vpop.permute.xlu0 %404
      %406 = vrot.lane.b32.xlu0 %v258, 32
      %v407 = vpop.permute.xlu0 %406
      %408 = vrot.lane.b32.xlu0 %v259, 32
      %v409 = vpop.permute.xlu0 %408
      %410 = vrot.lane.b32.xlu0 %v260, 32
      %v411 = vpop.permute.xlu0 %410
      %412 = vrot.lane.b32.xlu0 %v261, 32
      %v413 = vpop.permute.xlu0 %412
      %414 = vrot.lane.b32.xlu0 %v262, 32
      %v415 = vpop.permute.xlu0 %414
      %416 = vrot.lane.b32.xlu0 %v263, 32
      %v417 = vpop.permute.xlu0 %416
      %418 = vrot.lane.b32.xlu0 %v264, 32
      %v419 = vpop.permute.xlu0 %418
      %420 = vrot.lane.b32.xlu0 %v265, 32
      %v421 = vpop.permute.xlu0 %420
      %422 = vrot.lane.b32.xlu0 %v266, 32
      %v423 = vpop.permute.xlu0 %422
      %424 = vrot.lane.b32.xlu0 %v267, 32
      %v425 = vpop.permute.xlu0 %424
      %442 = vrot.lane.b32.xlu0 %v255, 48
      %v443 = vpop.permute.xlu0 %442
      %444 = vrot.lane.b32.xlu0 %v256, 48
      %v445 = vpop.permute.xlu0 %444
      %446 = vrot.lane.b32.xlu0 %v257, 48
      %v447 = vpop.permute.xlu0 %446
      %448 = vrot.lane.b32.xlu0 %v258, 48
      %v449 = vpop.permute.xlu0 %448
      %450 = vrot.lane.b32.xlu0 %v259, 48
      %v451 = vpop.permute.xlu0 %450
      %452 = vrot.lane.b32.xlu0 %v260, 48
      %v453 = vpop.permute.xlu0 %452
      %454 = vrot.lane.b32.xlu0 %v261, 48
      %v455 = vpop.permute.xlu0 %454
      %456 = vrot.lane.b32.xlu0 %v262, 48
      %v457 = vpop.permute.xlu0 %456
      %458 = vrot.lane.b32.xlu0 %v263, 48
      %v459 = vpop.permute.xlu0 %458
      %460 = vrot.lane.b32.xlu0 %v264, 48
      %v461 = vpop.permute.xlu0 %460
      %462 = vrot.lane.b32.xlu0 %v265, 48
      %v463 = vpop.permute.xlu0 %462
      %464 = vrot.lane.b32.xlu0 %v266, 48
      %v465 = vpop.permute.xlu0 %464
      %466 = vrot.lane.b32.xlu0 %v268, 48
      %v467 = vpop.permute.xlu0 %466
      %468 = vrot.lane.b32.xlu0 %v269, 48
      %v469 = vpop.permute.xlu0 %468
      %498 = vrot.lane.b32.xlu0 %v270, 64
      %v499 = vpop.permute.xlu0 %498
      %500 = vrot.lane.b32.xlu0 %v271, 64
      %v501 = vpop.permute.xlu0 %500
      %502 = vrot.lane.b32.xlu0 %v272, 64
      %v503 = vpop.permute.xlu0 %502
      %504 = vrot.lane.b32.xlu0 %v273, 64
      %v505 = vpop.permute.xlu0 %504
      %506 = vrot.lane.b32.xlu0 %v274, 64
      %v507 = vpop.permute.xlu0 %506
      %508 = vrot.lane.b32.xlu0 %v275, 64
      %v509 = vpop.permute.xlu0 %508
      %510 = vrot.lane.b32.xlu0 %v276, 64
      %v511 = vpop.permute.xlu0 %510
      %512 = vrot.lane.b32.xlu0 %v277, 64
      %v513 = vpop.permute.xlu0 %512
      %514 = vrot.lane.b32.xlu0 %v278, 64
      %v515 = vpop.permute.xlu0 %514
      %516 = vrot.lane.b32.xlu0 %v279, 64
      %v517 = vpop.permute.xlu0 %516
      %518 = vrot.lane.b32.xlu0 %v280, 64
      %v519 = vpop.permute.xlu0 %518
      %520 = vrot.lane.b32.xlu0 %v281, 64
      %v521 = vpop.permute.xlu0 %520
      %522 = vrot.lane.b32.xlu0 %v282, 64
      %v523 = vpop.permute.xlu0 %522
      %524 = vrot.lane.b32.xlu0 %v283, 64
      %v525 = vpop.permute.xlu0 %524
      %554 = vrot.lane.b32.xlu0 %v284, 80
      %v555 = vpop.permute.xlu0 %554
      %556 = vrot.lane.b32.xlu0 %v285, 80
      %v557 = vpop.permute.xlu0 %556
      %558 = vrot.lane.b32.xlu0 %v286, 80
      %v559 = vpop.permute.xlu0 %558
      %560 = vrot.lane.b32.xlu0 %v287, 80
      %v561 = vpop.permute.xlu0 %560
      %562 = vrot.lane.b32.xlu0 %v288, 80
      %v563 = vpop.permute.xlu0 %562
      %564 = vrot.lane.b32.xlu0 %v289, 80
      %v565 = vpop.permute.xlu0 %564
      %566 = vrot.lane.b32.xlu0 %v290, 80
      %v567 = vpop.permute.xlu0 %566
      %568 = vrot.lane.b32.xlu0 %v291, 80
      %v569 = vpop.permute.xlu0 %568
      %570 = vrot.lane.b32.xlu0 %v292, 80
      %v571 = vpop.permute.xlu0 %570
      %572 = vrot.lane.b32.xlu0 %v293, 80
      %v573 = vpop.permute.xlu0 %572
      %574 = vrot.lane.b32.xlu0 %v294, 80
      %v575 = vpop.permute.xlu0 %574
      %576 = vrot.lane.b32.xlu0 %v295, 80
      %v577 = vpop.permute.xlu0 %576
      %578 = vrot.lane.b32.xlu0 %v296, 80
      %v579 = vpop.permute.xlu0 %578
      %580 = vrot.lane.b32.xlu0 %v297, 80
      %v581 = vpop.permute.xlu0 %580
      %598 = vrot.lane.b32.xlu0 %v285, 96
      %v599 = vpop.permute.xlu0 %598
      %600 = vrot.lane.b32.xlu0 %v286, 96
      %v601 = vpop.permute.xlu0 %600
      %602 = vrot.lane.b32.xlu0 %v287, 96
      %v603 = vpop.permute.xlu0 %602
      %604 = vrot.lane.b32.xlu0 %v288, 96
      %v605 = vpop.permute.xlu0 %604
      %606 = vrot.lane.b32.xlu0 %v289, 96
      %v607 = vpop.permute.xlu0 %606
      %608 = vrot.lane.b32.xlu0 %v290, 96
      %v609 = vpop.permute.xlu0 %608
      %610 = vrot.lane.b32.xlu0 %v291, 96
      %v611 = vpop.permute.xlu0 %610
      %612 = vrot.lane.b32.xlu0 %v292, 96
      %v613 = vpop.permute.xlu0 %612
      %614 = vrot.lane.b32.xlu0 %v293, 96
      %v615 = vpop.permute.xlu0 %614
      %616 = vrot.lane.b32.xlu0 %v294, 96
      %v617 = vpop.permute.xlu0 %616
      %618 = vrot.lane.b32.xlu0 %v295, 96
      %v619 = vpop.permute.xlu0 %618
      %620 = vrot.lane.b32.xlu0 %v296, 96
      %v621 = vpop.permute.xlu0 %620
      %622 = vrot.lane.b32.xlu0 %v298, 96
      %v623 = vpop.permute.xlu0 %622
      %624 = vrot.lane.b32.xlu0 %v299, 96
      %v625 = vpop.permute.xlu0 %624
      %654 = vrot.lane.b32.xlu0 %v300, 112
      %v655 = vpop.permute.xlu0 %654
      %656 = vrot.lane.b32.xlu0 %v301, 112
      %v657 = vpop.permute.xlu0 %656
      %658 = vrot.lane.b32.xlu0 %v302, 112
      %v659 = vpop.permute.xlu0 %658
      %660 = vrot.lane.b32.xlu0 %v303, 112
      %v661 = vpop.permute.xlu0 %660
      %662 = vrot.lane.b32.xlu0 %v304, 112
      %v663 = vpop.permute.xlu0 %662
      %664 = vrot.lane.b32.xlu0 %v305, 112
      %v665 = vpop.permute.xlu0 %664
      %666 = vrot.lane.b32.xlu0 %v306, 112
      %v667 = vpop.permute.xlu0 %666
      %668 = vrot.lane.b32.xlu0 %v307, 112
      %v669 = vpop.permute.xlu0 %668
      %670 = vrot.lane.b32.xlu0 %v308, 112
      %v671 = vpop.permute.xlu0 %670
      %672 = vrot.lane.b32.xlu0 %v309, 112
      %v673 = vpop.permute.xlu0 %672
      %674 = vrot.lane.b32.xlu0 %v310, 112
      %v675 = vpop.permute.xlu0 %674
      %676 = vrot.lane.b32.xlu0 %v311, 112
      %v677 = vpop.permute.xlu0 %676
      %678 = vrot.lane.b32.xlu0 %v312, 112
      %v679 = vpop.permute.xlu0 %678
      %680 = vrot.lane.b32.xlu0 %v313, 112
      %v681 = vpop.permute.xlu0 %680
      %vm696 = vcmask 130048
      %v697 = vsel %vm696, %v226, %v343
      %v698 = vsel %vm696, %v227, %v345
      %v699 = vsel %vm696, %v228, %v347
      %v700 = vsel %vm696, %v229, %v349
      %v701 = vsel %vm696, %v230, %v351
      %v702 = vsel %vm696, %v231, %v353
      %v703 = vsel %vm696, %v232, %v355
      %v704 = vsel %vm696, %v233, %v357
      %v705 = vsel %vm696, %v234, %v359
      %v706 = vsel %vm696, %v235, %v361
      %v707 = vsel %vm696, %v236, %v363
      %v708 = vsel %vm696, %v237, %v365
      %v709 = vsel %vm696, %v238, %v367
      %v710 = vsel %vm696, %v239, %v369
      %vm711 = vcmask 261120
      %v712 = vsel %vm711, %v697, %v399
      %v713 = vsel %vm711, %v698, %v401
      %v714 = vsel %vm711, %v699, %v403
      %v715 = vsel %vm711, %v700, %v405
      %v716 = vsel %vm711, %v701, %v407
      %v717 = vsel %vm711, %v702, %v409
      %v718 = vsel %vm711, %v703, %v411
      %v719 = vsel %vm711, %v704, %v413
      %v720 = vsel %vm711, %v705, %v415
      %v721 = vsel %vm711, %v706, %v417
      %v722 = vsel %vm711, %v707, %v419
      %v723 = vsel %vm711, %v708, %v421
      %v724 = vsel %vm711, %v709, %v423
      %v725 = vsel %vm711, %v710, %v425
      %vm726 = vcmask 392192
      %v727 = vsel %vm726, %v712, %v443
      %v728 = vsel %vm726, %v713, %v445
      %v729 = vsel %vm726, %v714, %v447
      %v730 = vsel %vm726, %v715, %v449
      %v731 = vsel %vm726, %v716, %v451
      %v732 = vsel %vm726, %v717, %v453
      %v733 = vsel %vm726, %v718, %v455
      %v734 = vsel %vm726, %v719, %v457
      %v735 = vsel %vm726, %v720, %v459
      %v736 = vsel %vm726, %v721, %v461
      %v737 = vsel %vm726, %v722, %v463
      %v738 = vsel %vm726, %v723, %v465
      %v739 = vsel %vm726, %v724, %v467
      %v740 = vsel %vm726, %v725, %v469
      %vm741 = vcmask 523264
      %v742 = vsel %vm741, %v727, %v499
      %v743 = vsel %vm741, %v728, %v501
      %v744 = vsel %vm741, %v729, %v503
      %v745 = vsel %vm741, %v730, %v505
      %v746 = vsel %vm741, %v731, %v507
      %v747 = vsel %vm741, %v732, %v509
      %v748 = vsel %vm741, %v733, %v511
      %v749 = vsel %vm741, %v734, %v513
      %v750 = vsel %vm741, %v735, %v515
      %v751 = vsel %vm741, %v736, %v517
      %v752 = vsel %vm741, %v737, %v519
      %v753 = vsel %vm741, %v738, %v521
      %v754 = vsel %vm741, %v739, %v523
      %v755 = vsel %vm741, %v740, %v525
      %vm756 = vcmask 654336
      %v757 = vsel %vm756, %v742, %v555
      %v758 = vsel %vm756, %v743, %v557
      %v759 = vsel %vm756, %v744, %v559
      %v760 = vsel %vm756, %v745, %v561
      %v761 = vsel %vm756, %v746, %v563
      %v762 = vsel %vm756, %v747, %v565
      %v763 = vsel %vm756, %v748, %v567
      %v764 = vsel %vm756, %v749, %v569
      %v765 = vsel %vm756, %v750, %v571
      %v766 = vsel %vm756, %v751, %v573
      %v767 = vsel %vm756, %v752, %v575
      %v768 = vsel %vm756, %v753, %v577
      %v769 = vsel %vm756, %v754, %v579
      %v770 = vsel %vm756, %v755, %v581
      %vm771 = vcmask 785408
      %v772 = vsel %vm771, %v757, %v599
      %v773 = vsel %vm771, %v758, %v601
      %v774 = vsel %vm771, %v759, %v603
      %v775 = vsel %vm771, %v760, %v605
      %v776 = vsel %vm771, %v761, %v607
      %v777 = vsel %vm771, %v762, %v609
      %v778 = vsel %vm771, %v763, %v611
      %v779 = vsel %vm771, %v764, %v613
      %v780 = vsel %vm771, %v765, %v615
      %v781 = vsel %vm771, %v766, %v617
      %v782 = vsel %vm771, %v767, %v619
      %v783 = vsel %vm771, %v768, %v621
      %v784 = vsel %vm771, %v769, %v623
      %v785 = vsel %vm771, %v770, %v625
      %vm786 = vcmask 916480
      %v787 = vsel %vm786, %v772, %v655
      %v788 = vsel %vm786, %v773, %v657
      %v789 = vsel %vm786, %v774, %v659
      %v790 = vsel %vm786, %v775, %v661
      %v791 = vsel %vm786, %v776, %v663
      %v792 = vsel %vm786, %v777, %v665
      %v793 = vsel %vm786, %v778, %v667
      %v794 = vsel %vm786, %v779, %v669
      %v795 = vsel %vm786, %v780, %v671
      %v796 = vsel %vm786, %v781, %v673
      %v797 = vsel %vm786, %v782, %v675
      %v798 = vsel %vm786, %v783, %v677
      %v799 = vsel %vm786, %v784, %v679
      %v800 = vsel %vm786, %v785, %v681
      %v801 = vpack.c.bf16 %v788, %v787
      %v802 = vpack.c.bf16 %v315, %v314
      %v803 = vpack.c.bf16 %v790, %v789
      %v804 = vpack.c.bf16 %v317, %v316
      %v805 = vpack.c.bf16 %v792, %v791
      %v806 = vpack.c.bf16 %v319, %v318
      %v807 = vpack.c.bf16 %v794, %v793
      %v808 = vpack.c.bf16 %v321, %v320
      %v809 = vpack.c.bf16 %v796, %v795
      %v810 = vpack.c.bf16 %v323, %v322
      %v811 = vpack.c.bf16 %v798, %v797
      %v812 = vpack.c.bf16 %v325, %v324
      %v813 = vpack.c.bf16 %v800, %v799
      %v814 = vpack.c.bf16 %v327, %v326
      %v815 = vld [vmem:[%s2] sm:$0xf]
      %v816 = vld [vmem:[%s2 + $0x4] sm:$0xf]
      %v817 = vld [vmem:[%s2 + $0x8] sm:$0xf]
      %v818 = vld [vmem:[%s2 + $0xc] sm:$0xf]
      %v819 = vld [vmem:[%s2 + $0x10] sm:$0xf]
      %v820 = vld [vmem:[%s2 + $0x14] sm:$0xf]
      %v821 = vld [vmem:[%s2 + $0x18] sm:$0xf]
      %v822 = vld [vmem:[%s2 + $0x1c] sm:$0xf]
      %v823 = vld [vmem:[%s2 + $0x20] sm:$0xf]
      %v824 = vld [vmem:[%s2 + $0x24] sm:$0xf]
      %v825 = vld [vmem:[%s2 + $0x28] sm:$0xf]
      %v826 = vld [vmem:[%s2 + $0x2c] sm:$0xf]
      %v827 = vld [vmem:[%s2 + $0x30] sm:$0xf]
      %v828 = vld [vmem:[%s2 + $0x34] sm:$0xf]
      %v829 = vld [vmem:[%s2 + $0x38] sm:$0xf]
      %v830 = vld [vmem:[%s2 + $0x3c] sm:$0xf]
      %v831 = vld [vmem:[%s2 + $0x40] sm:$0xf]
      %v832 = vld [vmem:[%s2 + $0x44] sm:$0xf]
      %v851 = vunpack.c.l.b16 %v815
      %v852 = vunpack.c.l.b16 %v816
      %v853 = vunpack.c.l.b16 %v817
      %v854 = vunpack.c.l.b16 %v818
      %v855 = vunpack.c.l.b16 %v819
      %v856 = vunpack.c.l.b16 %v820
      %v857 = vunpack.c.l.b16 %v821
      %v858 = vunpack.c.l.b16 %v822
      %v859 = vunpack.c.l.b16 %v823
      %v860 = vunpack.c.l.b16 %v824
      %v861 = vunpack.c.l.b16 %v825
      %v862 = vunpack.c.l.b16 %v826
      %v863 = vunpack.c.l.b16 %v827
      %v864 = vunpack.c.l.b16 %v828
      %v865 = vunpack.c.l.b16 %v829
      %v866 = vunpack.c.l.b16 %v830
      %v867 = vunpack.c.l.b16 %v831
      %v868 = vunpack.c.l.b16 %v832
      %v869 = vpack.c.b16 %v852, %v851
      %v870 = vpack.c.b16 %v854, %v853
      %v871 = vpack.c.b16 %v856, %v855
      %v872 = vpack.c.b16 %v858, %v857
      %v873 = vpack.c.b16 %v860, %v859
      %v874 = vpack.c.b16 %v862, %v861
      %v875 = vpack.c.b16 %v864, %v863
      %v876 = vpack.c.b16 %v866, %v865
      %v877 = vpack.c.b16 %v868, %v867
      %v888 = vsel %vm696, %v802, 0
      %v891 = vsel %vm696, %v804, 0
      %v894 = vsel %vm696, %v806, 0
      %v897 = vsel %vm696, %v808, 0
      %v900 = vsel %vm696, %v810, 0
      %v903 = vsel %vm696, %v812, 0
      %v906 = vsel %vm696, %v814, 0
      %908 = vmatpush.bf16.msra.mxu0 %v876
      %909 = vmatpush.bf16.msra.mxu0 %v875
      %910 = vmatpush.bf16.msra.mxu0 %v874
      %911 = vmatpush.bf16.msra.mxu0 %v873
      %912 = vmatpush.bf16.msra.mxu0 %v872
      %913 = vmatpush.bf16.msra.mxu0 %v871
      %914 = vmatpush.bf16.msra.mxu0 %v870
      %915 = vmatpush.bf16.msra.mxu0 %v869
      %916 = vmatmul.bf16.gmra.mxu0 %v801
      %v917 = vpop.f32.mrf.mxu0
      %v918 = vadd.f32 0.0, %v917
      %v919 = vpop.f32.mrf.mxu0
      %v920 = vadd.f32 0.0, %v919
      %921 = vmatmul.bf16.gmra.mxu0 %v803
      %v922 = vpop.f32.mrf.mxu0
      %v923 = vadd.f32 0.0, %v922
      %v924 = vpop.f32.mrf.mxu0
      %v925 = vadd.f32 0.0, %v924
      %926 = vmatmul.bf16.gmra.mxu0 %v805
      %v927 = vpop.f32.mrf.mxu0
      %v928 = vadd.f32 0.0, %v927
      %v929 = vpop.f32.mrf.mxu0
      %v930 = vadd.f32 0.0, %v929
      %931 = vmatmul.bf16.gmra.mxu0 %v807
      %v932 = vpop.f32.mrf.mxu0
      %v933 = vadd.f32 0.0, %v932
      %v934 = vpop.f32.mrf.mxu0
      %v935 = vadd.f32 0.0, %v934
      %936 = vmatmul.bf16.gmra.mxu0 %v809
      %v937 = vpop.f32.mrf.mxu0
      %v938 = vadd.f32 0.0, %v937
      %v939 = vpop.f32.mrf.mxu0
      %v940 = vadd.f32 0.0, %v939
      %941 = vmatmul.bf16.gmra.mxu0 %v811
      %v942 = vpop.f32.mrf.mxu0
      %v943 = vadd.f32 0.0, %v942
      %v944 = vpop.f32.mrf.mxu0
      %v945 = vadd.f32 0.0, %v944
      %946 = vmatmul.bf16.gmra.mxu0 %v813
      %v947 = vpop.f32.mrf.mxu0
      %v948 = vadd.f32 0.0, %v947
      %v949 = vpop.f32.mrf.mxu0
      %v950 = vadd.f32 0.0, %v949
      %951 = vdwg.mxu0
      %952 = vmatpush.bf16.msra.mxu0 0
      %953 = vmatpush.bf16.msra.mxu0 0
      %954 = vmatpush.bf16.msra.mxu0 0
      %955 = vmatpush.bf16.msra.mxu0 0
      %956 = vmatpush.bf16.msra.mxu0 0
      %957 = vmatpush.bf16.msra.mxu0 0
      %958 = vmatpush.bf16.msra.mxu0 0
      %959 = vmatpush.bf16.msra.mxu0 %v877
      %960 = vmatmul.bf16.gmra.mxu0 %v888
      %v961 = vpop.f32.mrf.mxu0
      %v962 = vadd.f32 %v918, %v961
      %v963 = vpop.f32.mrf.mxu0
      %v964 = vadd.f32 %v920, %v963
      %965 = vmatmul.bf16.gmra.mxu0 %v891
      %v966 = vpop.f32.mrf.mxu0
      %v967 = vadd.f32 %v923, %v966
      %v968 = vpop.f32.mrf.mxu0
      %v969 = vadd.f32 %v925, %v968
      %970 = vmatmul.bf16.gmra.mxu0 %v894
      %v971 = vpop.f32.mrf.mxu0
      %v972 = vadd.f32 %v928, %v971
      %v973 = vpop.f32.mrf.mxu0
      %v974 = vadd.f32 %v930, %v973
      %975 = vmatmul.bf16.gmra.mxu0 %v897
      %v976 = vpop.f32.mrf.mxu0
      %v977 = vadd.f32 %v933, %v976
      %v978 = vpop.f32.mrf.mxu0
      %v979 = vadd.f32 %v935, %v978
      %980 = vmatmul.bf16.gmra.mxu0 %v900
      %v981 = vpop.f32.mrf.mxu0
      %v982 = vadd.f32 %v938, %v981
      %v983 = vpop.f32.mrf.mxu0
      %v984 = vadd.f32 %v940, %v983
      %985 = vmatmul.bf16.gmra.mxu0 %v903
      %v986 = vpop.f32.mrf.mxu0
      %v987 = vadd.f32 %v943, %v986
      %v988 = vpop.f32.mrf.mxu0
      %v989 = vadd.f32 %v945, %v988
      %990 = vmatmul.bf16.gmra.mxu0 %v906
      %v991 = vpop.f32.mrf.mxu0
      %v992 = vadd.f32 %v948, %v991
      %v993 = vpop.f32.mrf.mxu0
      %v994 = vadd.f32 %v950, %v993
      %995 = vdwg.mxu0
      %v996 = vld [vmem:[%s3] sm:$0x1]
      %v998 = vperm.slane %v996, 0
      %v1000 = vmul.f32 %v962, %v998
      %v1001 = vmul.f32 %v964, %v998
      %v1002 = vmul.f32 %v967, %v998
      %v1003 = vmul.f32 %v969, %v998
      %v1004 = vmul.f32 %v972, %v998
      %v1005 = vmul.f32 %v974, %v998
      %v1006 = vmul.f32 %v977, %v998
      %v1007 = vmul.f32 %v979, %v998
      %v1008 = vmul.f32 %v982, %v998
      %v1009 = vmul.f32 %v984, %v998
      %v1010 = vmul.f32 %v987, %v998
      %v1011 = vmul.f32 %v989, %v998
      %v1012 = vmul.f32 %v992, %v998
      %v1013 = vmul.f32 %v994, %v998
      %v1014 = vld [vmem:[%s4] sm:$0x1]
      %v1016 = vperm.slane %v1014, 0
      %v1018 = vadd.f32 %v1000, %v1016
      %v1019 = vadd.f32 %v1001, %v1016
      %v1020 = vadd.f32 %v1002, %v1016
      %v1021 = vadd.f32 %v1003, %v1016
      %v1022 = vadd.f32 %v1004, %v1016
      %v1023 = vadd.f32 %v1005, %v1016
      %v1024 = vadd.f32 %v1006, %v1016
      %v1025 = vadd.f32 %v1007, %v1016
      %v1026 = vadd.f32 %v1008, %v1016
      %v1027 = vadd.f32 %v1009, %v1016
      %v1028 = vadd.f32 %v1010, %v1016
      %v1029 = vadd.f32 %v1011, %v1016
      %v1030 = vadd.f32 %v1012, %v1016
      %v1031 = vadd.f32 %v1013, %v1016
      %v1032 = vmax.f32 %v1018, 0.0
      %v1033 = vmax.f32 %v1019, 0.0
      %v1034 = vmax.f32 %v1020, 0.0
      %v1035 = vmax.f32 %v1021, 0.0
      %v1036 = vmax.f32 %v1022, 0.0
      %v1037 = vmax.f32 %v1023, 0.0
      %v1038 = vmax.f32 %v1024, 0.0
      %v1039 = vmax.f32 %v1025, 0.0
      %v1040 = vmax.f32 %v1026, 0.0
      %v1041 = vmax.f32 %v1027, 0.0
      %v1042 = vmax.f32 %v1028, 0.0
      %v1043 = vmax.f32 %v1029, 0.0
      %v1044 = vmax.f32 %v1030, 0.0
      %v1045 = vmax.f32 %v1031, 0.0
      %v1046 = vld [vmem:[%s1] sm:$0xff]
      %v1047 = vld [vmem:[%s1 + $0x8] sm:$0xff]
      %v1048 = vld [vmem:[%s1 + $0x10] sm:$0xff]
      %v1049 = vld [vmem:[%s1 + $0x18] sm:$0xff]
      %v1050 = vld [vmem:[%s1 + $0x20] sm:$0xff]
      %v1051 = vld [vmem:[%s1 + $0x28] sm:$0xff]
      %v1052 = vld [vmem:[%s1 + $0x30] sm:$0xff]
      %v1053 = vld [vmem:[%s1 + $0x38] sm:$0xff]
      %v1054 = vld [vmem:[%s1 + $0x40] sm:$0xff]
      %v1055 = vld [vmem:[%s1 + $0x48] sm:$0xff]
      %v1056 = vld [vmem:[%s1 + $0x50] sm:$0xff]
      %v1057 = vld [vmem:[%s1 + $0x58] sm:$0xff]
      %v1058 = vld [vmem:[%s1 + $0x60] sm:$0xff]
      %v1059 = vld [vmem:[%s1 + $0x68] sm:$0x3f]
      %1061 = vset.pattern.permute.xlu0 0
      %1062 = vperm.xlu0 %1061, %v1046
      %v1063 = vpop.permute.xlu0 %1062
      %1066 = vset.pattern.permute.xlu0 0
      %1067 = vperm.xlu0 %1066, %v1047
      %v1068 = vpop.permute.xlu0 %1067
      %1071 = vset.pattern.permute.xlu0 0
      %1072 = vperm.xlu0 %1071, %v1048
      %v1073 = vpop.permute.xlu0 %1072
      %1076 = vset.pattern.permute.xlu0 0
      %1077 = vperm.xlu0 %1076, %v1049
      %v1078 = vpop.permute.xlu0 %1077
      %1081 = vset.pattern.permute.xlu0 0
      %1082 = vperm.xlu0 %1081, %v1050
      %v1083 = vpop.permute.xlu0 %1082
      %1086 = vset.pattern.permute.xlu0 0
      %1087 = vperm.xlu0 %1086, %v1051
      %v1088 = vpop.permute.xlu0 %1087
      %1091 = vset.pattern.permute.xlu0 0
      %1092 = vperm.xlu0 %1091, %v1052
      %v1093 = vpop.permute.xlu0 %1092
      %1096 = vset.pattern.permute.xlu0 0
      %1097 = vperm.xlu0 %1096, %v1053
      %v1098 = vpop.permute.xlu0 %1097
      %1101 = vset.pattern.permute.xlu0 0
      %1102 = vperm.xlu0 %1101, %v1054
      %v1103 = vpop.permute.xlu0 %1102
      %1106 = vset.pattern.permute.xlu0 0
      %1107 = vperm.xlu0 %1106, %v1055
      %v1108 = vpop.permute.xlu0 %1107
      %1111 = vset.pattern.permute.xlu0 0
      %1112 = vperm.xlu0 %1111, %v1056
      %v1113 = vpop.permute.xlu0 %1112
      %1116 = vset.pattern.permute.xlu0 0
      %1117 = vperm.xlu0 %1116, %v1057
      %v1118 = vpop.permute.xlu0 %1117
      %1121 = vset.pattern.permute.xlu0 0
      %1122 = vperm.xlu0 %1121, %v1058
      %v1123 = vpop.permute.xlu0 %1122
      %1126 = vset.pattern.permute.xlu0 0
      %1127 = vperm.xlu0 %1126, %v1059
      %v1128 = vpop.permute.xlu0 %1127
      %v1130 = vmul.f32 %v1032, %v1063
      %v1131 = vmul.f32 %v1033, %v1068
      %v1132 = vmul.f32 %v1034, %v1073
      %v1133 = vmul.f32 %v1035, %v1078
      %v1134 = vmul.f32 %v1036, %v1083
      %v1135 = vmul.f32 %v1037, %v1088
      %v1136 = vmul.f32 %v1038, %v1093
      %v1137 = vmul.f32 %v1039, %v1098
      %v1138 = vmul.f32 %v1040, %v1103
      %v1139 = vmul.f32 %v1041, %v1108
      %v1140 = vmul.f32 %v1042, %v1113
      %v1141 = vmul.f32 %v1043, %v1118
      %v1142 = vmul.f32 %v1044, %v1123
      %v1143 = vmul.f32 %v1045, %v1128
      %1144 = vst.msk [vmem:[%s224] sm:$0xff] %vm711, %v1130
      %1145 = vst.msk [vmem:[%s224 + $0x8] sm:$0xff] %vm711, %v1131
      %1146 = vst.msk [vmem:[%s224 + $0x10] sm:$0xff] %vm711, %v1132
      %1147 = vst.msk [vmem:[%s224 + $0x18] sm:$0xff] %vm711, %v1133
      %1148 = vst.msk [vmem:[%s224 + $0x20] sm:$0xff] %vm711, %v1134
      %1149 = vst.msk [vmem:[%s224 + $0x28] sm:$0xff] %vm711, %v1135
      %1150 = vst.msk [vmem:[%s224 + $0x30] sm:$0xff] %vm711, %v1136
      %1151 = vst.msk [vmem:[%s224 + $0x38] sm:$0xff] %vm711, %v1137
      %1152 = vst.msk [vmem:[%s224 + $0x40] sm:$0xff] %vm711, %v1138
      %1153 = vst.msk [vmem:[%s224 + $0x48] sm:$0xff] %vm711, %v1139
      %1154 = vst.msk [vmem:[%s224 + $0x50] sm:$0xff] %vm711, %v1140
      %1155 = vst.msk [vmem:[%s224 + $0x58] sm:$0xff] %vm711, %v1141
      %1156 = vst.msk [vmem:[%s224 + $0x60] sm:$0xff] %vm711, %v1142
      %vm1157 = vcmask 259072
      %1158 = vst.msk [vmem:[%s224 + $0x68] sm:$0x3f] %vm1157, %v1143
      %p1159 = scmp.lt.s32.totalorder %s16, 1
      %s1160 = scalar_select %p1159, %s16, 1
      %s1161 = smul.addr %s1160, 14
      %s1162 = smul.addr %s1161, 8
      %s1163 = scalar_lea.vmem %s5, %s1162
      // Predicated region
      $region41: #{residual_block_forward.2} parent=39 // pred_check
        %p1164 = pneg %p144
      $region42: #{residual_block_forward.2} parent=39 // pred_check_branch
        %1166 = sbr.rel (%p1164) target = $region44
      $region43: #{residual_block_forward.2} parent=39 // pred_region
        _
      $region44: #{residual_block_forward.2} parent=39 // pred_fallthru
        _
    $region40: #{residual_block_forward.2} parent=5 // pred_fallthru
      _
    %p1167 = scmp.le.s32.totalorder 2, %s11
    // Predicated region
    $region45: #{residual_block_forward.2} parent=5 // pred_check
      %p1168 = pneg %p1167
    $region46: #{residual_block_forward.2} parent=5 // pred_check_branch
      %1170 = sbr.rel (%p1168) target = $region48
    $region47: #{residual_block_forward.2} parent=5 // pred_region
      %s1171 = ssub.s32 %s11, 2
      // Predicated region
      $region49: #{residual_block_forward.2} parent=47 // pred_check
        %p1172 = pneg %p150
      $region50: #{residual_block_forward.2} parent=47 // pred_check_branch
        %1174 = sbr.rel (%p1172) target = $region52
      $region51: #{residual_block_forward.2} parent=47 // pred_region
        %p1175 = scmp.lt.s32.totalorder %s17, 1
        %s1176 = scalar_select %p1175, %s17, 1
        %s1177 = smul.addr %s1176, 14
        %s1178 = smul.addr %s1177, 8
        %s1179 = scalar_lea.vmem %s5, %s1178
      $region52: #{residual_block_forward.2} parent=47 // pred_fallthru
        _
    $region48: #{residual_block_forward.2} parent=5 // pred_fallthru
      _
  $region6: #{residual_block_forward.2} parent=0 // loop_footer
    %s15 = sadd.s32 1, %s11
  $region7: #{residual_block_forward.2} parent=0 // loop_footer_branch
    %10 = sbr.rel target = $region3
  $region8: #{residual_block_forward.2} parent=0 // loop_exit
    _

</llo_original>
